<compile_context>
chip_gen: v7x
topology: tpu7x:2x2x1
jax: 0.10.0
libtpu: 0.0.40
codegen_flags: <defaults>
</compile_context>

<pallas_src>
import functools

import jax
import jax.numpy as jnp
import numpy as np
from jax.experimental import pallas as pl
from jax.experimental.pallas import tpu as pltpu

TILE_M = 256  # row tile: multiple of 8 sublanes, comfortably inside VMEM on v5e/v6e/v7x


def _round_up(x, m):
    return (x + m - 1) // m * m


# ----------------------------------------------------------------------------
# Pallas kernel: fused ConvLSTM cell step (gate matmul + LSTM update + 1x1 head)
# ----------------------------------------------------------------------------
def _convlstm_cell_kernel(patches_ref, c_ref, wg_ref, bg_ref, wo_ref, bo_ref,
                          out_ref, h_new_ref, c_new_ref):
    hidden = c_ref.shape[-1]

    # 3x3 conv over cat([x, h]) as im2col matmul -> (TILE_M, 4*hidden) gates.
    # bf16 operands, f32 accumulation (MXU bf16-native path).
    gates = jnp.dot(patches_ref[...], wg_ref[...],
                    preferred_element_type=jnp.float32) + bg_ref[...]

    # Gate math / state update in f32 (v5e VPU/EUP has no bf16 path).
    i_g = jax.nn.sigmoid(gates[:, 0 * hidden:1 * hidden])
    f_g = jax.nn.sigmoid(gates[:, 1 * hidden:2 * hidden])
    g_g = jnp.tanh(gates[:, 2 * hidden:3 * hidden])
    o_g = jax.nn.sigmoid(gates[:, 3 * hidden:4 * hidden])

    c_new = f_g * c_ref[...] + i_g * g_g
    h_new = o_g * jnp.tanh(c_new)

    c_new_ref[...] = c_new
    h_new_ref[...] = h_new
    # 1x1 output-head conv as a second (tiny-N) matmul, bf16 in / f32 out.
    out_ref[...] = jnp.dot(h_new.astype(wo_ref.dtype), wo_ref[...],
                           preferred_element_type=jnp.float32) + bo_ref[...]


def _im2col_3x3(x_nhwc, k_pad):
    """(N, H, W, C) -> (N*H*W, k_pad) f32 patches of a 3x3 'same' conv (glue)."""
    n, h, w, c = x_nhwc.shape
    xp = jnp.pad(x_nhwc, ((0, 0), (1, 1), (1, 1), (0, 0)))
    patches = [xp[:, dy:dy + h, dx:dx + w, :]
               for dy in range(3) for dx in range(3)]
    p = jnp.stack(patches, axis=3).reshape(n * h * w, 9 * c)   # (M, 9*C)
    if k_pad != 9 * c:
        p = jnp.pad(p, ((0, 0), (0, k_pad - 9 * c)))           # zero lanes -> no-op
    return p


@functools.partial(jax.jit, static_argnames=("hidden", "out_ch"))
def convlstm_cell_step(wg, bg, wo, bo, x_nhwc, h, c, *, hidden, out_ch):
    """One ConvLSTM cell step. Returns (head_out, h_new, c_new), all NHWC."""
    n, hh, ww, _ = x_nhwc.shape
    m = n * hh * ww
    k_pad = wg.shape[0]
    n_gates = 4 * hidden

    patches = _im2col_3x3(jnp.concatenate([x_nhwc, h], axis=-1), k_pad)
    c_flat = c.reshape(m, hidden)

    m_pad = _round_up(m, TILE_M)
    if m_pad != m:
        patches = jnp.pad(patches, ((0, m_pad - m), (0, 0)))
        c_flat = jnp.pad(c_flat, ((0, m_pad - m), (0, 0)))
    patches = patches.astype(jnp.bfloat16)

    grid = (m_pad // TILE_M,)

    flops = 2 * m_pad * k_pad * n_gates + 2 * m_pad * hidden * out_ch
    transcendentals = 5 * m_pad * hidden          # 3 sigmoid + 2 tanh per element
    bytes_accessed = (m_pad * k_pad * 2 + m_pad * hidden * 4      # patches + c in
                      + k_pad * n_gates * 2 + n_gates * 4         # wg + bg
                      + hidden * out_ch * 2 + out_ch * 4          # wo + bo
                      + m_pad * out_ch * 4 + 2 * m_pad * hidden * 4)  # outputs

    out, h_new, c_new = pl.pallas_call(
        _convlstm_cell_kernel,
        out_shape=(
            jax.ShapeDtypeStruct((m_pad, out_ch), jnp.float32),
            jax.ShapeDtypeStruct((m_pad, hidden), jnp.float32),
            jax.ShapeDtypeStruct((m_pad, hidden), jnp.float32),
        ),
        grid=grid,
        in_specs=[
            pl.BlockSpec((TILE_M, k_pad), lambda i: (i, 0)),     # row-tiled patches
            pl.BlockSpec((TILE_M, hidden), lambda i: (i, 0)),    # row-tiled cell state
            pl.BlockSpec((k_pad, n_gates), lambda i: (0, 0)),    # weights stay resident
            pl.BlockSpec((1, n_gates), lambda i: (0, 0)),
            pl.BlockSpec((hidden, out_ch), lambda i: (0, 0)),
            pl.BlockSpec((1, out_ch), lambda i: (0, 0)),
        ],
        out_specs=(
            pl.BlockSpec((TILE_M, out_ch), lambda i: (i, 0)),
            pl.BlockSpec((TILE_M, hidden), lambda i: (i, 0)),
            pl.BlockSpec((TILE_M, hidden), lambda i: (i, 0)),
        ),
        input_output_aliases={1: 2},   # c_flat -> c_new (recurrent state in place)
        compiler_params=pltpu.CompilerParams(
            dimension_semantics=("parallel",),        # megacore shard over M on v7x
            vmem_limit_bytes=32 * 1024 * 1024),
        cost_estimate=pl.CostEstimate(
            flops=int(flops), transcendentals=int(transcendentals),
            bytes_accessed=int(bytes_accessed)),
    )(patches, c_flat, wg, bg, wo, bo)

    return (out[:m].reshape(n, hh, ww, out_ch),
            h_new[:m].reshape(n, hh, ww, hidden),
            c_new[:m].reshape(n, hh, ww, hidden))


# Pure-JAX reference of the same cell step (for a silent correctness check).
def _cell_step_ref(params, x_nhwc, h, c):
    hidden = params['hidden']
    k_pad = params['wg'].shape[0]
    patches = _im2col_3x3(jnp.concatenate([x_nhwc, h], axis=-1), k_pad)
    m = patches.shape[0]
    gates = patches @ params['wg'].astype(jnp.float32) + params['bg']
    i_g = jax.nn.sigmoid(gates[:, 0 * hidden:1 * hidden])
    f_g = jax.nn.sigmoid(gates[:, 1 * hidden:2 * hidden])
    g_g = jnp.tanh(gates[:, 2 * hidden:3 * hidden])
    o_g = jax.nn.sigmoid(gates[:, 3 * hidden:4 * hidden])
    c_new = f_g * c.reshape(m, hidden) + i_g * g_g
    h_new = o_g * jnp.tanh(c_new)
    out = h_new @ params['wo'].astype(jnp.float32) + params['bo']
    return out, h_new, c_new


# ----------------------------------------------------------------------------
# Parameters + chained module
# ----------------------------------------------------------------------------
def make_cell_params(key, in_ch, hidden, out_ch):
    k1, k2, k3, k4 = jax.random.split(key, 4)
    kin = in_ch + hidden
    k_raw = 9 * kin
    k_pad = _round_up(k_raw, 128)        # 306 -> 384 (pred), 594 -> 640 (detect)
    wg = jax.random.normal(k1, (3, 3, kin, 4 * hidden), jnp.float32) * 0.05
    wg = wg.reshape(k_raw, 4 * hidden)
    wg = jnp.pad(wg, ((0, k_pad - k_raw), (0, 0)))            # zero rows for padded K
    bg = jax.random.normal(k2, (1, 4 * hidden), jnp.float32) * 0.05
    wo = jax.random.normal(k3, (hidden, out_ch), jnp.float32) * 0.05
    bo = jax.random.normal(k4, (1, out_ch), jnp.float32) * 0.05
    return dict(wg=wg.astype(jnp.bfloat16), bg=bg,
                wo=wo.astype(jnp.bfloat16), bo=bo,
                hidden=hidden, out_ch=out_ch)


class ConvLSTMChainedPallas:
    """Mirrors ConvLSTMChained.forward(t, input, prev) control flow."""

    def __init__(self, key, n_frames_ahead=2, n_frames=11):
        self.n_frames_ahead = n_frames_ahead
        self.n_frames = n_frames
        self.channels = 2
        kp, kd = jax.random.split(key)
        # pred_net: convLSTMPred(channels=2, hidden=32, ...) -> predicts a frame
        self.pred = make_cell_params(kp, self.channels, 32, self.channels)
        # detect_net: convLSTMDetect(channels=2, hidden=64, n_class=4)
        self.detect = make_cell_params(kd, self.channels, 64, 4)
        self.output_list = {'pred': [], 'detect': []}

    def init_prev(self, n, h, w):
        def zeros(hid):
            return (jnp.zeros((n, h, w, hid), jnp.float32),
                    jnp.zeros((n, h, w, hid), jnp.float32))
        return {'pred': zeros(self.pred['hidden']),
                'detect': zeros(self.detect['hidden'])}

    def _step(self, params, x, hc):
        return convlstm_cell_step(
            params['wg'], params['bg'], params['wo'], params['bo'],
            x, hc[0], hc[1],
            hidden=params['hidden'], out_ch=params['out_ch'])

    def __call__(self, t, x, prev):
        # TODO(synk): the time recurrence / branching is kept at Python level to
        # match the PyTorch forward(t, input, prev) API; fusing phases into a
        # lax.scan with VMEM-resident h/c is a further optimization.
        prev_p = prev['pred']
        prev_d = prev['detect']
        if t < self.n_frames_ahead - 1:
            out_p, h_p, c_p = self._step(self.pred, x, prev_p)
            prev = {'pred': (h_p, c_p), 'detect': prev_d}
            out_d = None
        elif t < self.n_frames - 1:
            out_p, h_p, c_p = self._step(self.pred, x, prev_p)
            out_d, h_d, c_d = self._step(self.detect, x, prev_d)
            prev = {'pred': (h_p, c_p), 'detect': (h_d, c_d)}
            self.output_list['pred'].append(out_p)
            self.output_list['detect'].append(out_d)
        else:
            idx = self.n_frames_ahead - (t - (self.n_frames - 1))
            out_d, h_d, c_d = self._step(
                self.detect, self.output_list['pred'][idx], prev_d)
            prev['detect'] = (h_d, c_d)
            self.output_list['detect'].append(out_d)
        return out_d, prev


# ----------------------------------------------------------------------------
if __name__ == "__main__":
    key = jax.random.PRNGKey(0)
    k_model, k_data = jax.random.split(key)

    N, C, H, W = 2, 2, 16, 16        # NCHW, PyTorch convention (channels=2 fixed)
    n_frames, n_frames_ahead = 11, 2
    model = ConvLSTMChainedPallas(k_model, n_frames_ahead, n_frames)

    # deterministic synthetic video: (T, N, C, H, W)
    frames_nchw = jax.random.normal(
        k_data, (n_frames, N, C, H, W), jnp.float32)
    frames = jnp.transpose(frames_nchw, (0, 1, 3, 4, 2))   # -> NHWC

    # silent correctness check of the Pallas cell vs pure-JAX reference
    # (bf16 matmul operands in the kernel -> loosened tolerances)
    prev0 = model.init_prev(N, H, W)
    p = model.pred
    out_k, h_k, c_k = model._step(p, frames[0], prev0['pred'])
    out_r, h_r, c_r = _cell_step_ref(p, frames[0], *prev0['pred'])
    np.testing.assert_allclose(np.asarray(out_k).reshape(out_r.shape),
                               np.asarray(out_r), rtol=3e-2, atol=3e-2)
    np.testing.assert_allclose(np.asarray(h_k).reshape(h_r.shape),
                               np.asarray(h_r), rtol=3e-2, atol=3e-2)

    # run the chained forward over the full schedule
    prev = model.init_prev(N, H, W)
    out_d = None
    total_steps = n_frames + n_frames_ahead - 1   # t = 0..11
    for t in range(total_steps):
        x_t = frames[min(t, n_frames - 1)]        # unused in final branch
        out_d, prev = model(t, x_t, prev)

    jax.block_until_ready(out_d)
    jax.block_until_ready(prev['detect'][0])
    print("KERNEL_OK")
</pallas_src>

<mosaic_0001>
module attributes {stable_mosaic.version = 11 : i64} {
  func.func @_convlstm_cell_kernel(%arg0: i32, %arg1: memref<256x384xbf16, #tpu.memory_space<vmem>>, %arg2: memref<256x32xf32, #tpu.memory_space<vmem>>, %arg3: memref<384x128xbf16, #tpu.memory_space<vmem>>, %arg4: memref<1x128xf32, #tpu.memory_space<vmem>>, %arg5: memref<32x2xbf16, #tpu.memory_space<vmem>>, %arg6: memref<1x2xf32, #tpu.memory_space<vmem>>, %arg7: memref<256x2xf32, #tpu.memory_space<vmem>>, %arg8: memref<256x32xf32, #tpu.memory_space<vmem>>, %arg9: memref<256x32xf32, #tpu.memory_space<vmem>>) attributes {dimension_semantics = [#tpu.dimension_semantics<parallel>], iteration_bounds = array<i64: 2>, scalar_prefetch = 0 : i64, scratch_operands = 0 : i64, tpu.core_type = #tpu.core_type<tc>, window_params = [{transform_indices = @transform_0, window_bounds = array<i64: 256, 384>}, {transform_indices = @transform_1, window_bounds = array<i64: 256, 32>}, {pipeline_mode = #tpu.pipeline_mode<synchronous>, transform_indices = @transform_2, window_bounds = array<i64: 384, 128>}, {pipeline_mode = #tpu.pipeline_mode<synchronous>, transform_indices = @transform_3, window_bounds = array<i64: 1, 128>}, {pipeline_mode = #tpu.pipeline_mode<synchronous>, transform_indices = @transform_4, window_bounds = array<i64: 32, 2>}, {pipeline_mode = #tpu.pipeline_mode<synchronous>, transform_indices = @transform_5, window_bounds = array<i64: 1, 2>}, {transform_indices = @transform_6, window_bounds = array<i64: 256, 2>}, {transform_indices = @transform_7, window_bounds = array<i64: 256, 32>}, {transform_indices = @transform_8, window_bounds = array<i64: 256, 32>}]} {
    %c0 = arith.constant 0 : index
    %c0_0 = arith.constant 0 : index
    %0 = vector.load %arg1[%c0, %c0_0] : memref<256x384xbf16, #tpu.memory_space<vmem>>, vector<256x384xbf16>
    %c0_1 = arith.constant 0 : index
    %c0_2 = arith.constant 0 : index
    %1 = vector.load %arg3[%c0_1, %c0_2] : memref<384x128xbf16, #tpu.memory_space<vmem>>, vector<384x128xbf16>
    %cst = arith.constant dense<0.000000e+00> : vector<256x128xf32>
    %2 = tpu.matmul %0, %1, %cst {dimension_numbers = #tpu.dot_dimension_numbers<[1], [0], [0], [1], [0, 0, 1, 1], [], []>} : vector<256x384xbf16>, vector<384x128xbf16>, vector<256x128xf32> -> vector<256x128xf32>
    %c0_3 = arith.constant 0 : index
    %c0_4 = arith.constant 0 : index
    %3 = vector.load %arg4[%c0_3, %c0_4] : memref<1x128xf32, #tpu.memory_space<vmem>>, vector<1x128xf32>
    %4 = vector.broadcast %3 : vector<1x128xf32> to vector<256x128xf32>
    %5 = arith.addf %2, %4 : vector<256x128xf32>
    %6 = vector.extract_strided_slice %5 {offsets = [0, 0], sizes = [256, 32], strides = [1, 1]} : vector<256x128xf32> to vector<256x32xf32>
    %7 = arith.negf %6 : vector<256x32xf32>
    %8 = math.exp %7 : vector<256x32xf32>
    %cst_5 = arith.constant 1.000000e+00 : f32
    %9 = vector.broadcast %cst_5 : f32 to vector<256x32xf32>
    %10 = arith.addf %9, %8 : vector<256x32xf32>
    %11 = arith.divf %9, %10 : vector<256x32xf32>
    %12 = vector.extract_strided_slice %5 {offsets = [0, 32], sizes = [256, 32], strides = [1, 1]} : vector<256x128xf32> to vector<256x32xf32>
    %13 = arith.negf %12 : vector<256x32xf32>
    %14 = math.exp %13 : vector<256x32xf32>
    %cst_6 = arith.constant 1.000000e+00 : f32
    %15 = vector.broadcast %cst_6 : f32 to vector<256x32xf32>
    %16 = arith.addf %15, %14 : vector<256x32xf32>
    %17 = arith.divf %15, %16 : vector<256x32xf32>
    %18 = vector.extract_strided_slice %5 {offsets = [0, 64], sizes = [256, 32], strides = [1, 1]} : vector<256x128xf32> to vector<256x32xf32>
    %19 = math.tanh %18 : vector<256x32xf32>
    %20 = vector.extract_strided_slice %5 {offsets = [0, 96], sizes = [256, 32], strides = [1, 1]} : vector<256x128xf32> to vector<256x32xf32>
    %21 = arith.negf %20 : vector<256x32xf32>
    %22 = math.exp %21 : vector<256x32xf32>
    %cst_7 = arith.constant 1.000000e+00 : f32
    %23 = vector.broadcast %cst_7 : f32 to vector<256x32xf32>
    %24 = arith.addf %23, %22 : vector<256x32xf32>
    %25 = arith.divf %23, %24 : vector<256x32xf32>
    %c0_8 = arith.constant 0 : index
    %c0_9 = arith.constant 0 : index
    %26 = vector.load %arg2[%c0_8, %c0_9] : memref<256x32xf32, #tpu.memory_space<vmem>>, vector<256x32xf32>
    %27 = arith.mulf %17, %26 : vector<256x32xf32>
    %28 = arith.mulf %11, %19 : vector<256x32xf32>
    %29 = arith.addf %27, %28 : vector<256x32xf32>
    %30 = math.tanh %29 : vector<256x32xf32>
    %31 = arith.mulf %25, %30 : vector<256x32xf32>
    %c0_10 = arith.constant 0 : index
    %c0_11 = arith.constant 0 : index
    %32 = vector.load %arg9[%c0_10, %c0_11] : memref<256x32xf32, #tpu.memory_space<vmem>>, vector<256x32xf32>
    tpu.vector_store %arg9[%c0_10, %c0_11], %29 {strides = array<i32>} : memref<256x32xf32, #tpu.memory_space<vmem>>, vector<256x32xf32>,
    %c0_12 = arith.constant 0 : index
    %c0_13 = arith.constant 0 : index
    %33 = vector.load %arg8[%c0_12, %c0_13] : memref<256x32xf32, #tpu.memory_space<vmem>>, vector<256x32xf32>
    tpu.vector_store %arg8[%c0_12, %c0_13], %31 {strides = array<i32>} : memref<256x32xf32, #tpu.memory_space<vmem>>, vector<256x32xf32>,
    %34 = arith.truncf %31 : vector<256x32xf32> to vector<256x32xbf16>
    %c0_14 = arith.constant 0 : index
    %c0_15 = arith.constant 0 : index
    %35 = vector.load %arg5[%c0_14, %c0_15] : memref<32x2xbf16, #tpu.memory_space<vmem>>, vector<32x2xbf16>
    %cst_16 = arith.constant dense<0.000000e+00> : vector<256x2xf32>
    %36 = tpu.matmul %34, %35, %cst_16 {dimension_numbers = #tpu.dot_dimension_numbers<[1], [0], [0], [1], [0, 0, 1, 1], [], []>} : vector<256x32xbf16>, vector<32x2xbf16>, vector<256x2xf32> -> vector<256x2xf32>
    %c0_17 = arith.constant 0 : index
    %c0_18 = arith.constant 0 : index
    %37 = vector.load %arg6[%c0_17, %c0_18] : memref<1x2xf32, #tpu.memory_space<vmem>>, vector<1x2xf32>
    %38 = vector.broadcast %37 : vector<1x2xf32> to vector<256x2xf32>
    %39 = arith.addf %36, %38 : vector<256x2xf32>
    %c0_19 = arith.constant 0 : index
    %c0_20 = arith.constant 0 : index
    %40 = vector.load %arg7[%c0_19, %c0_20] : memref<256x2xf32, #tpu.memory_space<vmem>>, vector<256x2xf32>
    tpu.vector_store %arg7[%c0_19, %c0_20], %39 {strides = array<i32>} : memref<256x2xf32, #tpu.memory_space<vmem>>, vector<256x2xf32>,
    return
  }
  func.func @transform_0(%arg0: i32) -> (i32, i32) {
    %c0_i32 = arith.constant 0 : i32
    %c0_i32_0 = arith.constant 0 : i32
    return %arg0, %c0_i32 : i32, i32
  }
  func.func @transform_1(%arg0: i32) -> (i32, i32) {
    %c0_i32 = arith.constant 0 : i32
    %c0_i32_0 = arith.constant 0 : i32
    return %arg0, %c0_i32 : i32, i32
  }
  func.func @transform_2(%arg0: i32) -> (i32, i32) {
    %c0_i32 = arith.constant 0 : i32
    %c0_i32_0 = arith.constant 0 : i32
    %c0_i32_1 = arith.constant 0 : i32
    return %c0_i32, %c0_i32_0 : i32, i32
  }
  func.func @transform_3(%arg0: i32) -> (i32, i32) {
    %c0_i32 = arith.constant 0 : i32
    %c0_i32_0 = arith.constant 0 : i32
    %c0_i32_1 = arith.constant 0 : i32
    return %c0_i32, %c0_i32_0 : i32, i32
  }
  func.func @transform_4(%arg0: i32) -> (i32, i32) {
    %c0_i32 = arith.constant 0 : i32
    %c0_i32_0 = arith.constant 0 : i32
    %c0_i32_1 = arith.constant 0 : i32
    return %c0_i32, %c0_i32_0 : i32, i32
  }
  func.func @transform_5(%arg0: i32) -> (i32, i32) {
    %c0_i32 = arith.constant 0 : i32
    %c0_i32_0 = arith.constant 0 : i32
    %c0_i32_1 = arith.constant 0 : i32
    return %c0_i32, %c0_i32_0 : i32, i32
  }
  func.func @transform_6(%arg0: i32) -> (i32, i32) {
    %c0_i32 = arith.constant 0 : i32
    %c0_i32_0 = arith.constant 0 : i32
    return %arg0, %c0_i32 : i32, i32
  }
  func.func @transform_7(%arg0: i32) -> (i32, i32) {
    %c0_i32 = arith.constant 0 : i32
    %c0_i32_0 = arith.constant 0 : i32
    return %arg0, %c0_i32 : i32, i32
  }
  func.func @transform_8(%arg0: i32) -> (i32, i32) {
    %c0_i32 = arith.constant 0 : i32
    %c0_i32_0 = arith.constant 0 : i32
    return %arg0, %c0_i32 : i32, i32
  }
}

</mosaic_0001>

<llo_original>
// kernel: convlstm_cell_step.1
$region0: #{convlstm_cell_step.1}
  #allocation0 [shape = 'u32[]', space=smem, size = 0x4, offset = 0x4, fixed_abs, tag = 'smem constant byte address 0x4 - core index']
  #allocation1 [shape = 'u32[144,128]{1,0:T(1,128)}', space=vmem, size = 0x12000, scoped, tag = 'internal scratch']
  %s0 = inlined_call_operand.vmem [shape: bf16[512,384], index: 0, kind: input, shape index: {}]
  %s1 = inlined_call_operand.vmem [shape: f32[512,32], index: 1, kind: input, shape index: {}, may-alias: {1,8}]
  %s2 = inlined_call_operand.vmem [shape: bf16[384,128], index: 2, kind: input, shape index: {}]
  %s3 = inlined_call_operand.vmem [shape: f32[1,128], index: 3, kind: input, shape index: {}]
  %s4 = inlined_call_operand.vmem [shape: bf16[32,2], index: 4, kind: input, shape index: {}]
  %s5 = inlined_call_operand.vmem [shape: f32[1,2], index: 5, kind: input, shape index: {}]
  %s6 = inlined_call_operand.vmem [shape: f32[512,2], index: 6, kind: output, shape index: {0}]
  %s7 = inlined_call_operand.hbm [shape: f32[512,32], index: 7, kind: output, shape index: {1}]
  %s8 = inlined_call_operand.vmem [shape: f32[512,32], index: 8, kind: output, shape index: {2}, may-alias: {1,8}]
  %9 = xla_tuple %s6, %s7, %s8
  %s10 = sld [smem:[#allocation0]]
  $region73: #{convlstm_cell_step.1} parent=0
    _
  %s12 = ssub.s32 1, %s10
  %s13 = scalar_select 0, %s12, %s10
  $region1: #{convlstm_cell_step.1} parent=0
    #allocation2 [shape = 'u8[262144]{0}', space=vmem, size = 0x40000, scoped, tag = 'output window, operand 1']
    #allocation3 [shape = 's32[2]{0}', space=sflag, size = 0x8, scoped, tag = 'scoped memory for convlstm_cell_step.1']
    %14 = vsyncpa [#allocation3], 0
    %s15 = scalar_lea.sflag [#allocation3], 1
    %16 = vsyncpa %s15, 0
    loop: start=0, step=1, limit=4
    $region2: #{convlstm_cell_step.1} parent=1 // loop_pre_header
      _
    $region3: #{convlstm_cell_step.1} parent=1 // loop_header
      %s18 = sphi 0, %s22
      %p19 = scmp.ge.s32.totalorder %s18, 4
      %s28 = sphi 0, %s30
      %s31 = sphi 0, %s28
      %s32 = sphi 0, %s31
      %s48 = sphi 0, %s32
      %s54 = sphi 0, %s56
      %s57 = sphi 0, %s54
      %s58 = sphi 0, %s57
      %s74 = sphi 0, %s58
      %s78 = sphi 0, %s78
      %s80 = sphi 0, %s78
      %s81 = sphi 0, %s80
      %s95 = sphi 0, %s81
      %s99 = sphi 0, %s99
      %s101 = sphi 0, %s99
      %s102 = sphi 0, %s101
      %s116 = sphi 0, %s102
      %s120 = sphi 0, %s120
      %s122 = sphi 0, %s120
      %s123 = sphi 0, %s122
      %s137 = sphi 0, %s123
      %s141 = sphi 0, %s141
      %s143 = sphi 0, %s141
      %s144 = sphi 0, %s143
      %s158 = sphi 0, %s144
      %s164 = sphi 0, %s166
      %s167 = sphi 0, %s164
      %s168 = sphi 0, %s167
      %s184 = sphi 0, %s168
      %s190 = sphi 0, %s192
      %s193 = sphi 0, %s190
      %s194 = sphi 0, %s193
      %s210 = sphi 0, %s194
      %s216 = sphi 0, %s218
      %s219 = sphi 0, %s216
      %s220 = sphi 0, %s219
      %s236 = sphi 0, %s220
    $region4: #{convlstm_cell_step.1} parent=1 // loop_header_branch
      %21 = sbr.rel (%p19) target = $region8
    $region5: #{convlstm_cell_step.1} parent=1 // loop_body
      %s23 = ssub.s32 %s18, 1
      %s24 = ssub.s32 %s18, 2
      %s25 = sadd.s32 %s18, 1
      %s26 = ssub.s32 %s18, %s25
      %p27 = scmp.eq.s32.totalorder %s26, 0
      %s29 = sadd.s32 %s28, 1
      %s30 = scalar_select %p27, %s28, %s29
      %p33 = pneg %p27
      %p34 = scmp.eq.s32.totalorder %s18, 1
      %p35 = por %p33, %p34
      %p36 = scmp.ne.s32.totalorder %s28, %s31
      %p37 = scmp.eq.s32.totalorder %s18, 0
      %p38 = por %p36, %p37
      %p39 = scmp.ne.s32.totalorder %s28, %s31
      %p40 = scmp.eq.s32.totalorder %s23, 1
      %p41 = por %p39, %p40
      %p42 = scmp.ne.s32.totalorder %s31, %s32
      %p43 = scmp.eq.s32.totalorder %s23, 0
      %p44 = por %p42, %p43
      %p45 = scmp.ne.s32.totalorder %s31, %s32
      %p46 = scmp.eq.s32.totalorder %s24, 1
      %p47 = por %p45, %p46
      %p49 = scmp.ne.s32.totalorder %s32, %s48
      %p50 = scmp.eq.s32.totalorder %s24, 0
      %p51 = por %p49, %p50
      %s52 = ssub.s32 %s18, %s25
      %p53 = scmp.eq.s32.totalorder %s52, 0
      %s55 = sadd.s32 %s54, 1
      %s56 = scalar_select %p53, %s54, %s55
      %p59 = pneg %p53
      %p60 = scmp.eq.s32.totalorder %s18, 1
      %p61 = por %p59, %p60
      %p62 = scmp.ne.s32.totalorder %s54, %s57
      %p63 = scmp.eq.s32.totalorder %s18, 0
      %p64 = por %p62, %p63
      %p65 = scmp.ne.s32.totalorder %s54, %s57
      %p66 = scmp.eq.s32.totalorder %s23, 1
      %p67 = por %p65, %p66
      %p68 = scmp.ne.s32.totalorder %s57, %s58
      %p69 = scmp.eq.s32.totalorder %s23, 0
      %p70 = por %p68, %p69
      %p71 = scmp.ne.s32.totalorder %s57, %s58
      %p72 = scmp.eq.s32.totalorder %s24, 1
      %p73 = por %p71, %p72
      %p75 = scmp.ne.s32.totalorder %s58, %s74
      %p76 = scmp.eq.s32.totalorder %s24, 0
      %p77 = por %p75, %p76
      %s79 = sadd.s32 %s78, 1
      %p82 = scmp.eq.s32.totalorder %s18, 1
      %p83 = scmp.ne.s32.totalorder %s78, %s80
      %p84 = scmp.eq.s32.totalorder %s18, 0
      %p85 = por %p83, %p84
      %p86 = scmp.ne.s32.totalorder %s78, %s80
      %p87 = scmp.eq.s32.totalorder %s23, 1
      %p88 = por %p86, %p87
      %p89 = scmp.ne.s32.totalorder %s80, %s81
      %p90 = scmp.eq.s32.totalorder %s23, 0
      %p91 = por %p89, %p90
      %p92 = scmp.ne.s32.totalorder %s80, %s81
      %p93 = scmp.eq.s32.totalorder %s24, 1
      %p94 = por %p92, %p93
      %p96 = scmp.ne.s32.totalorder %s81, %s95
      %p97 = scmp.eq.s32.totalorder %s24, 0
      %p98 = por %p96, %p97
      %s100 = sadd.s32 %s99, 1
      %p103 = scmp.eq.s32.totalorder %s18, 1
      %p104 = scmp.ne.s32.totalorder %s99, %s101
      %p105 = scmp.eq.s32.totalorder %s18, 0
      %p106 = por %p104, %p105
      %p107 = scmp.ne.s32.totalorder %s99, %s101
      %p108 = scmp.eq.s32.totalorder %s23, 1
      %p109 = por %p107, %p108
      %p110 = scmp.ne.s32.totalorder %s101, %s102
      %p111 = scmp.eq.s32.totalorder %s23, 0
      %p112 = por %p110, %p111
      %p113 = scmp.ne.s32.totalorder %s101, %s102
      %p114 = scmp.eq.s32.totalorder %s24, 1
      %p115 = por %p113, %p114
      %p117 = scmp.ne.s32.totalorder %s102, %s116
      %p118 = scmp.eq.s32.totalorder %s24, 0
      %p119 = por %p117, %p118
      %s121 = sadd.s32 %s120, 1
      %p124 = scmp.eq.s32.totalorder %s18, 1
      %p125 = scmp.ne.s32.totalorder %s120, %s122
      %p126 = scmp.eq.s32.totalorder %s18, 0
      %p127 = por %p125, %p126
      %p128 = scmp.ne.s32.totalorder %s120, %s122
      %p129 = scmp.eq.s32.totalorder %s23, 1
      %p130 = por %p128, %p129
      %p131 = scmp.ne.s32.totalorder %s122, %s123
      %p132 = scmp.eq.s32.totalorder %s23, 0
      %p133 = por %p131, %p132
      %p134 = scmp.ne.s32.totalorder %s122, %s123
      %p135 = scmp.eq.s32.totalorder %s24, 1
      %p136 = por %p134, %p135
      %p138 = scmp.ne.s32.totalorder %s123, %s137
      %p139 = scmp.eq.s32.totalorder %s24, 0
      %p140 = por %p138, %p139
      %s142 = sadd.s32 %s141, 1
      %p145 = scmp.eq.s32.totalorder %s18, 1
      %p146 = scmp.ne.s32.totalorder %s141, %s143
      %p147 = scmp.eq.s32.totalorder %s18, 0
      %p148 = por %p146, %p147
      %p149 = scmp.ne.s32.totalorder %s141, %s143
      %p150 = scmp.eq.s32.totalorder %s23, 1
      %p151 = por %p149, %p150
      %p152 = scmp.ne.s32.totalorder %s143, %s144
      %p153 = scmp.eq.s32.totalorder %s23, 0
      %p154 = por %p152, %p153
      %p155 = scmp.ne.s32.totalorder %s143, %s144
      %p156 = scmp.eq.s32.totalorder %s24, 1
      %p157 = por %p155, %p156
      %p159 = scmp.ne.s32.totalorder %s144, %s158
      %p160 = scmp.eq.s32.totalorder %s24, 0
      %p161 = por %p159, %p160
      %s162 = ssub.s32 %s18, %s25
      %p163 = scmp.eq.s32.totalorder %s162, 0
      %s165 = sadd.s32 %s164, 1
      %s166 = scalar_select %p163, %s164, %s165
      %p169 = pneg %p163
      %p170 = scmp.eq.s32.totalorder %s18, 1
      %p171 = por %p169, %p170
      %p172 = scmp.ne.s32.totalorder %s164, %s167
      %p173 = scmp.eq.s32.totalorder %s18, 0
      %p174 = por %p172, %p173
      %p175 = scmp.ne.s32.totalorder %s164, %s167
      %p176 = scmp.eq.s32.totalorder %s23, 1
      %p177 = por %p175, %p176
      %p178 = scmp.ne.s32.totalorder %s167, %s168
      %p179 = scmp.eq.s32.totalorder %s23, 0
      %p180 = por %p178, %p179
      %p181 = scmp.ne.s32.totalorder %s167, %s168
      %p182 = scmp.eq.s32.totalorder %s24, 1
      %p183 = por %p181, %p182
      %p185 = scmp.ne.s32.totalorder %s168, %s184
      %p186 = scmp.eq.s32.totalorder %s24, 0
      %p187 = por %p185, %p186
      %s188 = ssub.s32 %s18, %s25
      %p189 = scmp.eq.s32.totalorder %s188, 0
      %s191 = sadd.s32 %s190, 1
      %s192 = scalar_select %p189, %s190, %s191
      %p195 = pneg %p189
      %p196 = scmp.eq.s32.totalorder %s18, 1
      %p197 = por %p195, %p196
      %p198 = scmp.ne.s32.totalorder %s190, %s193
      %p199 = scmp.eq.s32.totalorder %s18, 0
      %p200 = por %p198, %p199
      %p201 = scmp.ne.s32.totalorder %s190, %s193
      %p202 = scmp.eq.s32.totalorder %s23, 1
      %p203 = por %p201, %p202
      %p204 = scmp.ne.s32.totalorder %s193, %s194
      %p205 = scmp.eq.s32.totalorder %s23, 0
      %p206 = por %p204, %p205
      %p207 = scmp.ne.s32.totalorder %s193, %s194
      %p208 = scmp.eq.s32.totalorder %s24, 1
      %p209 = por %p207, %p208
      %p211 = scmp.ne.s32.totalorder %s194, %s210
      %p212 = scmp.eq.s32.totalorder %s24, 0
      %p213 = por %p211, %p212
      %s214 = ssub.s32 %s18, %s25
      %p215 = scmp.eq.s32.totalorder %s214, 0
      %s217 = sadd.s32 %s216, 1
      %s218 = scalar_select %p215, %s216, %s217
      %p221 = pneg %p215
      %p222 = scmp.eq.s32.totalorder %s18, 1
      %p223 = por %p221, %p222
      %p224 = scmp.ne.s32.totalorder %s216, %s219
      %p225 = scmp.eq.s32.totalorder %s18, 0
      %p226 = por %p224, %p225
      %p227 = scmp.ne.s32.totalorder %s216, %s219
      %p228 = scmp.eq.s32.totalorder %s23, 1
      %p229 = por %p227, %p228
      %p230 = scmp.ne.s32.totalorder %s219, %s220
      %p231 = scmp.eq.s32.totalorder %s23, 0
      %p232 = por %p230, %p231
      %p233 = scmp.ne.s32.totalorder %s219, %s220
      %p234 = scmp.eq.s32.totalorder %s24, 1
      %p235 = por %p233, %p234
      %p237 = scmp.ne.s32.totalorder %s220, %s236
      %p238 = scmp.eq.s32.totalorder %s24, 0
      %p239 = por %p237, %p238
      %p240 = scmp.le.s32.totalorder 1, %s18
      %p241 = scmp.lt.s32.totalorder %s18, 3
      %p242 = pnand %p240, %p241
      %p243 = pneg %p242
      // Predicated region
      $region9: #{convlstm_cell_step.1} parent=5 // pred_check
        _
      $region10: #{convlstm_cell_step.1} parent=5 // pred_check_branch
        %245 = sbr.rel (%p242) target = $region12
      $region11: #{convlstm_cell_step.1} parent=5 // pred_region
        %s246 = ssub.s32 %s18, 1
        // Predicated region
        $region13: #{convlstm_cell_step.1} parent=11 // pred_check
          %p247 = pneg %p91
        $region14: #{convlstm_cell_step.1} parent=11 // pred_check_branch
          %249 = sbr.rel (%p247) target = $region16
        $region15: #{convlstm_cell_step.1} parent=11 // pred_region
          _
        $region16: #{convlstm_cell_step.1} parent=11 // pred_fallthru
          _
        // Predicated region
        $region17: #{convlstm_cell_step.1} parent=11 // pred_check
          %p250 = pneg %p112
        $region18: #{convlstm_cell_step.1} parent=11 // pred_check_branch
          %252 = sbr.rel (%p250) target = $region20
        $region19: #{convlstm_cell_step.1} parent=11 // pred_region
          _
        $region20: #{convlstm_cell_step.1} parent=11 // pred_fallthru
          _
        // Predicated region
        $region21: #{convlstm_cell_step.1} parent=11 // pred_check
          %p253 = pneg %p133
        $region22: #{convlstm_cell_step.1} parent=11 // pred_check_branch
          %255 = sbr.rel (%p253) target = $region24
        $region23: #{convlstm_cell_step.1} parent=11 // pred_region
          _
        $region24: #{convlstm_cell_step.1} parent=11 // pred_fallthru
          _
        // Predicated region
        $region25: #{convlstm_cell_step.1} parent=11 // pred_check
          %p256 = pneg %p154
        $region26: #{convlstm_cell_step.1} parent=11 // pred_check_branch
          %258 = sbr.rel (%p256) target = $region28
        $region27: #{convlstm_cell_step.1} parent=11 // pred_region
          _
        $region28: #{convlstm_cell_step.1} parent=11 // pred_fallthru
          _
      $region12: #{convlstm_cell_step.1} parent=5 // pred_fallthru
        _
      %p259 = scmp.lt.s32.totalorder %s18, 2
      // Predicated region
      $region29: #{convlstm_cell_step.1} parent=5 // pred_check
        %p260 = pneg %p259
      $region30: #{convlstm_cell_step.1} parent=5 // pred_check_branch
        %262 = sbr.rel (%p260) target = $region32
      $region31: #{convlstm_cell_step.1} parent=5 // pred_region
        // Predicated region
        $region33: #{convlstm_cell_step.1} parent=31 // pred_check
          %p263 = pneg %p38
        $region34: #{convlstm_cell_step.1} parent=31 // pred_check_branch
          %265 = sbr.rel (%p263) target = $region36
        $region35: #{convlstm_cell_step.1} parent=31 // pred_region
          %s266 = smul.u32 32, %s18
          %p267 = scmp.lt.s32.totalorder %s266, 63
          %s268 = scalar_select %p267, %s266, 63
          %s269 = smul.addr %s268, 3
          %s270 = smul.addr %s269, 4
          %s271 = scalar_lea.vmem %s0, %s270
          %s272 = smul.u32 32, %s18
        $region36: #{convlstm_cell_step.1} parent=31 // pred_fallthru
          _
        // Predicated region
        $region37: #{convlstm_cell_step.1} parent=31 // pred_check
          %p273 = pneg %p64
        $region38: #{convlstm_cell_step.1} parent=31 // pred_check_branch
          %275 = sbr.rel (%p273) target = $region40
        $region39: #{convlstm_cell_step.1} parent=31 // pred_region
          %s276 = smul.u32 32, %s18
          %p277 = scmp.lt.s32.totalorder %s276, 63
          %s278 = scalar_select %p277, %s276, 63
          %s279 = smul.addr %s278, 8
          %s280 = scalar_lea.vmem %s1, %s279
          %s281 = smul.u32 32, %s18
        $region40: #{convlstm_cell_step.1} parent=31 // pred_fallthru
          _
      $region32: #{convlstm_cell_step.1} parent=5 // pred_fallthru
        _
      %p282 = scmp.le.s32.totalorder 1, %s18
      %p283 = scmp.lt.s32.totalorder %s18, 3
      %p284 = pnand %p282, %p283
      %p285 = pneg %p284
      // Predicated region
      $region41: #{convlstm_cell_step.1} parent=5 // pred_check
        _
      $region42: #{convlstm_cell_step.1} parent=5 // pred_check_branch
        %287 = sbr.rel (%p284) target = $region44
      $region43: #{convlstm_cell_step.1} parent=5 // pred_region
        %s288 = ssub.s32 %s18, 1
        %s289 = smul.u32 32, %s23
        %p290 = scmp.lt.s32.totalorder %s289, 63
        %s291 = scalar_select %p290, %s289, 63
        %s292 = smul.addr %s291, 3
        %s293 = smul.addr %s292, 4
        %s294 = scalar_lea.vmem %s0, %s293
        %p295 = pneg %p44
        %p296 = pneg %p41
        %s297 = smul.u32 32, %s23
        %p298 = scmp.lt.s32.totalorder %s297, 63
        %s299 = scalar_select %p298, %s297, 63
        %s300 = smul.addr %s299, 8
        %s301 = scalar_lea.vmem %s1, %s300
        %p302 = pneg %p70
        %p303 = pneg %p67
        %p304 = pneg %p91
        %p305 = pneg %p88
        %p306 = pneg %p112
        %p307 = pneg %p109
        %p308 = pneg %p133
        %p309 = pneg %p130
        %p310 = pneg %p154
        %p311 = pneg %p151
        %p312 = pneg %p180
        %p313 = pneg %p177
        %s314 = smul.u32 32, %s23
        %p315 = scmp.lt.s32.totalorder %s314, 63
        %s316 = scalar_select %p315, %s314, 63
        %s317 = smul.addr %s316, 8
        %s318 = scalar_lea.vmem %s6, %s317
        %p319 = pneg %p206
        %p320 = pneg %p203
        %s321 = sand.u32 %s193, 1
        %s322 = scalar_lea.sflag [#allocation3], %s321
        %s323 = sand.u32 %s193, 1
        %s324 = smul.addr %s323, 256
        %s325 = scalar_lea.vmem [#allocation2], %s324
        %p326 = pneg %p232
        %p327 = pneg %p229
        %s328 = smul.u32 32, %s23
        %p329 = scmp.lt.s32.totalorder %s328, 63
        %s330 = scalar_select %p329, %s328, 63
        %s331 = smul.addr %s330, 8
        %s332 = scalar_lea.vmem %s8, %s331
        %s333 = smul.u32 32, %s23
        %p334 = scmp.lt.s32.totalorder %s333, 63
        %s335 = scalar_select %p334, %s333, 63
        %s336 = smul.addr %s335, 3
        %s337 = smul.addr %s336, 4
        %s338 = scalar_lea.vmem %s0, %s337
        %s339 = smul.u32 32, %s23
        %s340 = smul.u32 32, %s23
        %p341 = scmp.lt.s32.totalorder %s340, 63
        %s342 = scalar_select %p341, %s340, 63
        %s343 = smul.addr %s342, 8
        %s344 = scalar_lea.vmem %s1, %s343
        %s345 = smul.u32 32, %s23
        %s346 = smul.u32 32, %s23
        %p347 = scmp.lt.s32.totalorder %s346, 63
        %s348 = scalar_select %p347, %s346, 63
        %s349 = smul.addr %s348, 8
        %s350 = scalar_lea.vmem %s6, %s349
        %s351 = smul.u32 32, %s23
        %s352 = smul.u32 32, %s23
        %s353 = smul.u32 32, %s23
        %p354 = scmp.lt.s32.totalorder %s353, 63
        %s355 = scalar_select %p354, %s353, 63
        %s356 = smul.addr %s355, 8
        %s357 = scalar_lea.vmem %s8, %s356
        %s358 = smul.u32 32, %s23
        %v360 = vld [vmem:[%s338] sm:$0xff]
        %v361 = vld [vmem:[%s338 + $0x8] sm:$0xf]
        %v362 = vld [vmem:[%s338 + $0xc] sm:$0xff]
        %v363 = vld [vmem:[%s338 + $0x14] sm:$0xf]
        %v364 = vld [vmem:[%s338 + $0x18] sm:$0xff]
        %v365 = vld [vmem:[%s338 + $0x20] sm:$0xf]
        %v366 = vld [vmem:[%s338 + $0x24] sm:$0xff]
        %v367 = vld [vmem:[%s338 + $0x2c] sm:$0xf]
        %v368 = vld [vmem:[%s338 + $0x30] sm:$0xff]
        %v369 = vld [vmem:[%s338 + $0x38] sm:$0xf]
        %v370 = vld [vmem:[%s338 + $0x3c] sm:$0xff]
        %v371 = vld [vmem:[%s338 + $0x44] sm:$0xf]
        %v372 = vld [vmem:[%s338 + $0x48] sm:$0xff]
        %v373 = vld [vmem:[%s338 + $0x50] sm:$0xf]
        %v374 = vld [vmem:[%s338 + $0x54] sm:$0xff]
        %v375 = vld [vmem:[%s338 + $0x5c] sm:$0xf]
        %v376 = vld [vmem:[%s338 + $0x60] sm:$0xff]
        %v377 = vld [vmem:[%s338 + $0x68] sm:$0xf]
        %v378 = vld [vmem:[%s338 + $0x6c] sm:$0xff]
        %v379 = vld [vmem:[%s338 + $0x74] sm:$0xf]
        %v380 = vld [vmem:[%s338 + $0x78] sm:$0xff]
        %v381 = vld [vmem:[%s338 + $0x80] sm:$0xf]
        %v382 = vld [vmem:[%s338 + $0x84] sm:$0xff]
        %v383 = vld [vmem:[%s338 + $0x8c] sm:$0xf]
        %v384 = vld [vmem:[%s338 + $0x90] sm:$0xff]
        %v385 = vld [vmem:[%s338 + $0x98] sm:$0xf]
        %v386 = vld [vmem:[%s338 + $0x9c] sm:$0xff]
        %v387 = vld [vmem:[%s338 + $0xa4] sm:$0xf]
        %v388 = vld [vmem:[%s338 + $0xa8] sm:$0xff]
        %v389 = vld [vmem:[%s338 + $0xb0] sm:$0xf]
        %v390 = vld [vmem:[%s338 + $0xb4] sm:$0xff]
        %v391 = vld [vmem:[%s338 + $0xbc] sm:$0xf]
        %v392 = vld [vmem:[%s338 + $0xc0] sm:$0xff]
        %v393 = vld [vmem:[%s338 + $0xc8] sm:$0xf]
        %v394 = vld [vmem:[%s338 + $0xcc] sm:$0xff]
        %v395 = vld [vmem:[%s338 + $0xd4] sm:$0xf]
        %v396 = vld [vmem:[%s338 + $0xd8] sm:$0xff]
        %v397 = vld [vmem:[%s338 + $0xe0] sm:$0xf]
        %v398 = vld [vmem:[%s338 + $0xe4] sm:$0xff]
        %v399 = vld [vmem:[%s338 + $0xec] sm:$0xf]
        %v400 = vld [vmem:[%s338 + $0xf0] sm:$0xff]
        %v401 = vld [vmem:[%s338 + $0xf8] sm:$0xf]
        %v402 = vld [vmem:[%s338 + $0xfc] sm:$0xff]
        %v403 = vld [vmem:[%s338 + $0x104] sm:$0xf]
        %v404 = vld [vmem:[%s338 + $0x108] sm:$0xff]
        %v405 = vld [vmem:[%s338 + $0x110] sm:$0xf]
        %v406 = vld [vmem:[%s338 + $0x114] sm:$0xff]
        %v407 = vld [vmem:[%s338 + $0x11c] sm:$0xf]
        %v408 = vld [vmem:[%s338 + $0x120] sm:$0xff]
        %v409 = vld [vmem:[%s338 + $0x128] sm:$0xf]
        %v410 = vld [vmem:[%s338 + $0x12c] sm:$0xff]
        %v411 = vld [vmem:[%s338 + $0x134] sm:$0xf]
        %v412 = vld [vmem:[%s338 + $0x138] sm:$0xff]
        %v413 = vld [vmem:[%s338 + $0x140] sm:$0xf]
        %v414 = vld [vmem:[%s338 + $0x144] sm:$0xff]
        %v415 = vld [vmem:[%s338 + $0x14c] sm:$0xf]
        %v416 = vld [vmem:[%s338 + $0x150] sm:$0xff]
        %v417 = vld [vmem:[%s338 + $0x158] sm:$0xf]
        %v418 = vld [vmem:[%s338 + $0x15c] sm:$0xff]
        %v419 = vld [vmem:[%s338 + $0x164] sm:$0xf]
        %v420 = vld [vmem:[%s338 + $0x168] sm:$0xff]
        %v421 = vld [vmem:[%s338 + $0x170] sm:$0xf]
        %v422 = vld [vmem:[%s338 + $0x174] sm:$0xff]
        %v423 = vld [vmem:[%s338 + $0x17c] sm:$0xf]
        %v424 = vld [vmem:[%s2] sm:$0xf]
        %v425 = vld [vmem:[%s2 + $0x4] sm:$0xf]
        %v426 = vld [vmem:[%s2 + $0x8] sm:$0xf]
        %v427 = vld [vmem:[%s2 + $0xc] sm:$0xf]
        %v428 = vld [vmem:[%s2 + $0x10] sm:$0xf]
        %v429 = vld [vmem:[%s2 + $0x14] sm:$0xf]
        %v430 = vld [vmem:[%s2 + $0x18] sm:$0xf]
        %v431 = vld [vmem:[%s2 + $0x1c] sm:$0xf]
        %v432 = vld [vmem:[%s2 + $0x20] sm:$0xf]
        %v433 = vld [vmem:[%s2 + $0x24] sm:$0xf]
        %v434 = vld [vmem:[%s2 + $0x28] sm:$0xf]
        %v435 = vld [vmem:[%s2 + $0x2c] sm:$0xf]
        %v436 = vld [vmem:[%s2 + $0x30] sm:$0xf]
        %v437 = vld [vmem:[%s2 + $0x34] sm:$0xf]
        %v438 = vld [vmem:[%s2 + $0x38] sm:$0xf]
        %v439 = vld [vmem:[%s2 + $0x3c] sm:$0xf]
        %v440 = vld [vmem:[%s2 + $0x40] sm:$0xf]
        %v441 = vld [vmem:[%s2 + $0x44] sm:$0xf]
        %v442 = vld [vmem:[%s2 + $0x48] sm:$0xf]
        %v443 = vld [vmem:[%s2 + $0x4c] sm:$0xf]
        %v444 = vld [vmem:[%s2 + $0x50] sm:$0xf]
        %v445 = vld [vmem:[%s2 + $0x54] sm:$0xf]
        %v446 = vld [vmem:[%s2 + $0x58] sm:$0xf]
        %v447 = vld [vmem:[%s2 + $0x5c] sm:$0xf]
        %v448 = vld [vmem:[%s2 + $0x60] sm:$0xf]
        %v449 = vld [vmem:[%s2 + $0x64] sm:$0xf]
        %v450 = vld [vmem:[%s2 + $0x68] sm:$0xf]
        %v451 = vld [vmem:[%s2 + $0x6c] sm:$0xf]
        %v452 = vld [vmem:[%s2 + $0x70] sm:$0xf]
        %v453 = vld [vmem:[%s2 + $0x74] sm:$0xf]
        %v454 = vld [vmem:[%s2 + $0x78] sm:$0xf]
        %v455 = vld [vmem:[%s2 + $0x7c] sm:$0xf]
        %v456 = vld [vmem:[%s2 + $0x80] sm:$0xf]
        %v457 = vld [vmem:[%s2 + $0x84] sm:$0xf]
        %v458 = vld [vmem:[%s2 + $0x88] sm:$0xf]
        %v459 = vld [vmem:[%s2 + $0x8c] sm:$0xf]
        %v460 = vld [vmem:[%s2 + $0x90] sm:$0xf]
        %v461 = vld [vmem:[%s2 + $0x94] sm:$0xf]
        %v462 = vld [vmem:[%s2 + $0x98] sm:$0xf]
        %v463 = vld [vmem:[%s2 + $0x9c] sm:$0xf]
        %v464 = vld [vmem:[%s2 + $0xa0] sm:$0xf]
        %v465 = vld [vmem:[%s2 + $0xa4] sm:$0xf]
        %v466 = vld [vmem:[%s2 + $0xa8] sm:$0xf]
        %v467 = vld [vmem:[%s2 + $0xac] sm:$0xf]
        %v468 = vld [vmem:[%s2 + $0xb0] sm:$0xf]
        %v469 = vld [vmem:[%s2 + $0xb4] sm:$0xf]
        %v470 = vld [vmem:[%s2 + $0xb8] sm:$0xf]
        %v471 = vld [vmem:[%s2 + $0xbc] sm:$0xf]
        %v472 = vld [vmem:[%s3] sm:$0x1]
        %v474 = vlaneseq
        %v475 = vshrl.u32 %v474, 7
        %v476 = vsub.s32 0, %v475
        %v477 = vrot.slane %v472, %v476
        %v543 = vunpack.c.l.b16 %v360
        %v544 = vunpack.c.h.b16 %v360
        %v545 = vunpack.c.l.b16 %v361
        %v546 = vunpack.c.l.b16 %v362
        %v547 = vunpack.c.h.b16 %v362
        %v548 = vunpack.c.l.b16 %v363
        %v549 = vunpack.c.l.b16 %v364
        %v550 = vunpack.c.h.b16 %v364
        %v551 = vunpack.c.l.b16 %v365
        %v552 = vunpack.c.l.b16 %v366
        %v553 = vunpack.c.h.b16 %v366
        %v554 = vunpack.c.l.b16 %v367
        %v555 = vunpack.c.l.b16 %v368
        %v556 = vunpack.c.h.b16 %v368
        %v557 = vunpack.c.l.b16 %v369
        %v558 = vunpack.c.l.b16 %v370
        %v559 = vunpack.c.h.b16 %v370
        %v560 = vunpack.c.l.b16 %v371
        %v561 = vunpack.c.l.b16 %v372
        %v562 = vunpack.c.h.b16 %v372
        %v563 = vunpack.c.l.b16 %v373
        %v564 = vunpack.c.l.b16 %v374
        %v565 = vunpack.c.h.b16 %v374
        %v566 = vunpack.c.l.b16 %v375
        %v567 = vunpack.c.l.b16 %v376
        %v568 = vunpack.c.h.b16 %v376
        %v569 = vunpack.c.l.b16 %v377
        %v570 = vunpack.c.l.b16 %v378
        %v571 = vunpack.c.h.b16 %v378
        %v572 = vunpack.c.l.b16 %v379
        %v573 = vunpack.c.l.b16 %v380
        %v574 = vunpack.c.h.b16 %v380
        %v575 = vunpack.c.l.b16 %v381
        %v576 = vunpack.c.l.b16 %v382
        %v577 = vunpack.c.h.b16 %v382
        %v578 = vunpack.c.l.b16 %v383
        %v579 = vunpack.c.l.b16 %v384
        %v580 = vunpack.c.h.b16 %v384
        %v581 = vunpack.c.l.b16 %v385
        %v582 = vunpack.c.l.b16 %v386
        %v583 = vunpack.c.h.b16 %v386
        %v584 = vunpack.c.l.b16 %v387
        %v585 = vunpack.c.l.b16 %v388
        %v586 = vunpack.c.h.b16 %v388
        %v587 = vunpack.c.l.b16 %v389
        %v588 = vunpack.c.l.b16 %v390
        %v589 = vunpack.c.h.b16 %v390
        %v590 = vunpack.c.l.b16 %v391
        %v591 = vunpack.c.l.b16 %v392
        %v592 = vunpack.c.h.b16 %v392
        %v593 = vunpack.c.l.b16 %v393
        %v594 = vunpack.c.l.b16 %v394
        %v595 = vunpack.c.h.b16 %v394
        %v596 = vunpack.c.l.b16 %v395
        %v597 = vunpack.c.l.b16 %v396
        %v598 = vunpack.c.h.b16 %v396
        %v599 = vunpack.c.l.b16 %v397
        %v600 = vunpack.c.l.b16 %v398
        %v601 = vunpack.c.h.b16 %v398
        %v602 = vunpack.c.l.b16 %v399
        %v603 = vunpack.c.l.b16 %v400
        %v604 = vunpack.c.h.b16 %v400
        %v605 = vunpack.c.l.b16 %v401
        %v606 = vunpack.c.l.b16 %v402
        %v607 = vunpack.c.h.b16 %v402
        %v608 = vunpack.c.l.b16 %v403
        %v609 = vunpack.c.l.b16 %v404
        %v610 = vunpack.c.h.b16 %v404
        %v611 = vunpack.c.l.b16 %v405
        %v612 = vunpack.c.l.b16 %v406
        %v613 = vunpack.c.h.b16 %v406
        %v614 = vunpack.c.l.b16 %v407
        %v615 = vunpack.c.l.b16 %v408
        %v616 = vunpack.c.h.b16 %v408
        %v617 = vunpack.c.l.b16 %v409
        %v618 = vunpack.c.l.b16 %v410
        %v619 = vunpack.c.h.b16 %v410
        %v620 = vunpack.c.l.b16 %v411
        %v621 = vunpack.c.l.b16 %v412
        %v622 = vunpack.c.h.b16 %v412
        %v623 = vunpack.c.l.b16 %v413
        %v624 = vunpack.c.l.b16 %v414
        %v625 = vunpack.c.h.b16 %v414
        %v626 = vunpack.c.l.b16 %v415
        %v627 = vunpack.c.l.b16 %v416
        %v628 = vunpack.c.h.b16 %v416
        %v629 = vunpack.c.l.b16 %v417
        %v630 = vunpack.c.l.b16 %v418
        %v631 = vunpack.c.h.b16 %v418
        %v632 = vunpack.c.l.b16 %v419
        %v633 = vunpack.c.l.b16 %v420
        %v634 = vunpack.c.h.b16 %v420
        %v635 = vunpack.c.l.b16 %v421
        %v636 = vunpack.c.l.b16 %v422
        %v637 = vunpack.c.h.b16 %v422
        %v638 = vunpack.c.l.b16 %v423
        %v639 = vpack.c.b16 %v546, %v543
        %v640 = vpack.c.b16 %v547, %v544
        %v641 = vpack.c.b16 %v548, %v545
        %v642 = vpack.c.b16 %v552, %v549
        %v643 = vpack.c.b16 %v553, %v550
        %v644 = vpack.c.b16 %v554, %v551
        %v645 = vpack.c.b16 %v558, %v555
        %v646 = vpack.c.b16 %v559, %v556
        %v647 = vpack.c.b16 %v560, %v557
        %v648 = vpack.c.b16 %v564, %v561
        %v649 = vpack.c.b16 %v565, %v562
        %v650 = vpack.c.b16 %v566, %v563
        %v651 = vpack.c.b16 %v570, %v567
        %v652 = vpack.c.b16 %v571, %v568
        %v653 = vpack.c.b16 %v572, %v569
        %v654 = vpack.c.b16 %v576, %v573
        %v655 = vpack.c.b16 %v577, %v574
        %v656 = vpack.c.b16 %v578, %v575
        %v657 = vpack.c.b16 %v582, %v579
        %v658 = vpack.c.b16 %v583, %v580
        %v659 = vpack.c.b16 %v584, %v581
        %v660 = vpack.c.b16 %v588, %v585
        %v661 = vpack.c.b16 %v589, %v586
        %v662 = vpack.c.b16 %v590, %v587
        %v663 = vpack.c.b16 %v594, %v591
        %v664 = vpack.c.b16 %v595, %v592
        %v665 = vpack.c.b16 %v596, %v593
        %v666 = vpack.c.b16 %v600, %v597
        %v667 = vpack.c.b16 %v601, %v598
        %v668 = vpack.c.b16 %v602, %v599
        %v669 = vpack.c.b16 %v606, %v603
        %v670 = vpack.c.b16 %v607, %v604
        %v671 = vpack.c.b16 %v608, %v605
        %v672 = vpack.c.b16 %v612, %v609
        %v673 = vpack.c.b16 %v613, %v610
        %v674 = vpack.c.b16 %v614, %v611
        %v675 = vpack.c.b16 %v618, %v615
        %v676 = vpack.c.b16 %v619, %v616
        %v677 = vpack.c.b16 %v620, %v617
        %v678 = vpack.c.b16 %v624, %v621
        %v679 = vpack.c.b16 %v625, %v622
        %v680 = vpack.c.b16 %v626, %v623
        %v681 = vpack.c.b16 %v630, %v627
        %v682 = vpack.c.b16 %v631, %v628
        %v683 = vpack.c.b16 %v632, %v629
        %v684 = vpack.c.b16 %v636, %v633
        %v685 = vpack.c.b16 %v637, %v634
        %v686 = vpack.c.b16 %v638, %v635
        %v783 = vunpack.c.l.b16 %v424
        %v784 = vunpack.c.l.b16 %v425
        %v785 = vunpack.c.l.b16 %v426
        %v786 = vunpack.c.l.b16 %v427
        %v787 = vunpack.c.l.b16 %v428
        %v788 = vunpack.c.l.b16 %v429
        %v789 = vunpack.c.l.b16 %v430
        %v790 = vunpack.c.l.b16 %v431
        %v791 = vunpack.c.l.b16 %v432
        %v792 = vunpack.c.l.b16 %v433
        %v793 = vunpack.c.l.b16 %v434
        %v794 = vunpack.c.l.b16 %v435
        %v795 = vunpack.c.l.b16 %v436
        %v796 = vunpack.c.l.b16 %v437
        %v797 = vunpack.c.l.b16 %v438
        %v798 = vunpack.c.l.b16 %v439
        %v799 = vunpack.c.l.b16 %v440
        %v800 = vunpack.c.l.b16 %v441
        %v801 = vunpack.c.l.b16 %v442
        %v802 = vunpack.c.l.b16 %v443
        %v803 = vunpack.c.l.b16 %v444
        %v804 = vunpack.c.l.b16 %v445
        %v805 = vunpack.c.l.b16 %v446
        %v806 = vunpack.c.l.b16 %v447
        %v807 = vunpack.c.l.b16 %v448
        %v808 = vunpack.c.l.b16 %v449
        %v809 = vunpack.c.l.b16 %v450
        %v810 = vunpack.c.l.b16 %v451
        %v811 = vunpack.c.l.b16 %v452
        %v812 = vunpack.c.l.b16 %v453
        %v813 = vunpack.c.l.b16 %v454
        %v814 = vunpack.c.l.b16 %v455
        %v815 = vunpack.c.l.b16 %v456
        %v816 = vunpack.c.l.b16 %v457
        %v817 = vunpack.c.l.b16 %v458
        %v818 = vunpack.c.l.b16 %v459
        %v819 = vunpack.c.l.b16 %v460
        %v820 = vunpack.c.l.b16 %v461
        %v821 = vunpack.c.l.b16 %v462
        %v822 = vunpack.c.l.b16 %v463
        %v823 = vunpack.c.l.b16 %v464
        %v824 = vunpack.c.l.b16 %v465
        %v825 = vunpack.c.l.b16 %v466
        %v826 = vunpack.c.l.b16 %v467
        %v827 = vunpack.c.l.b16 %v468
        %v828 = vunpack.c.l.b16 %v469
        %v829 = vunpack.c.l.b16 %v470
        %v830 = vunpack.c.l.b16 %v471
        %v831 = vpack.c.b16 %v784, %v783
        %v832 = vpack.c.b16 %v786, %v785
        %v833 = vpack.c.b16 %v788, %v787
        %v834 = vpack.c.b16 %v790, %v789
        %v835 = vpack.c.b16 %v792, %v791
        %v836 = vpack.c.b16 %v794, %v793
        %v837 = vpack.c.b16 %v796, %v795
        %v838 = vpack.c.b16 %v798, %v797
        %v839 = vpack.c.b16 %v800, %v799
        %v840 = vpack.c.b16 %v802, %v801
        %v841 = vpack.c.b16 %v804, %v803
        %v842 = vpack.c.b16 %v806, %v805
        %v843 = vpack.c.b16 %v808, %v807
        %v844 = vpack.c.b16 %v810, %v809
        %v845 = vpack.c.b16 %v812, %v811
        %v846 = vpack.c.b16 %v814, %v813
        %v847 = vpack.c.b16 %v816, %v815
        %v848 = vpack.c.b16 %v818, %v817
        %v849 = vpack.c.b16 %v820, %v819
        %v850 = vpack.c.b16 %v822, %v821
        %v851 = vpack.c.b16 %v824, %v823
        %v852 = vpack.c.b16 %v826, %v825
        %v853 = vpack.c.b16 %v828, %v827
        %v854 = vpack.c.b16 %v830, %v829
        %879 = vmatprep.subr.bf16.mxu0 0
        %880 = vmatpush1.bf16.msra.mxu0 %v831
        %881 = vmatprep.subr.bf16.mxu0 0
        %882 = vmatpush1.bf16.msra.mxu0 %v832
        %883 = vmatprep.subr.bf16.mxu0 0
        %884 = vmatpush1.bf16.msra.mxu0 %v833
        %885 = vmatprep.subr.bf16.mxu0 0
        %886 = vmatpush1.bf16.msra.mxu0 %v834
        %887 = vmatprep.subr.bf16.mxu0 0
        %888 = vmatpush1.bf16.msra.mxu0 %v835
        %889 = vmatprep.subr.bf16.mxu0 0
        %890 = vmatpush1.bf16.msra.mxu0 %v836
        %891 = vmatprep.subr.bf16.mxu0 0
        %892 = vmatpush1.bf16.msra.mxu0 %v837
        %893 = vmatprep.subr.bf16.mxu0 0
        %894 = vmatpush1.bf16.msra.mxu0 %v838
        %895 = vmatprep.subr.bf16.mxu0 0
        %896 = vmatpush1.bf16.msra.mxu0 %v839
        %897 = vmatprep.subr.bf16.mxu0 0
        %898 = vmatpush1.bf16.msra.mxu0 %v840
        %899 = vmatprep.subr.bf16.mxu0 0
        %900 = vmatpush1.bf16.msra.mxu0 %v841
        %901 = vmatprep.subr.bf16.mxu0 0
        %902 = vmatpush1.bf16.msra.mxu0 %v842
        %903 = vmatprep.subr.bf16.mxu0 0
        %904 = vmatpush1.bf16.msra.mxu0 %v843
        %905 = vmatprep.subr.bf16.mxu0 0
        %906 = vmatpush1.bf16.msra.mxu0 %v844
        %907 = vmatprep.subr.bf16.mxu0 0
        %908 = vmatpush1.bf16.msra.mxu0 %v845
        %909 = vmatprep.subr.bf16.mxu0 0
        %910 = vmatpush1.bf16.msra.mxu0 %v846
        %911 = vmatprep.mubr.bf16.mxu0 %v640
        %912 = vmatmul.mubr.bf16.gmra.mrb[0].mxu0 %v639
        %v913 = vpop.f32.mrb[0].mxu0
        %v914 = vadd.f32 %v477, %v913
        %v915 = vpop.f32.mrb[0].mxu0
        %v916 = vpop.f32.mrb[0].mxu0
        %v917 = vadd.f32 %v477, %v916
        %v918 = vpop.f32.mrb[0].mxu0
        %919 = vmatprep.mubr.bf16.mxu0 %v643
        %920 = vmatmul.mubr.bf16.gmra.mrb[0].mxu0 %v642
        %v921 = vpop.f32.mrb[0].mxu0
        %v922 = vadd.f32 %v477, %v921
        %v923 = vpop.f32.mrb[0].mxu0
        %v924 = vpop.f32.mrb[0].mxu0
        %v925 = vadd.f32 %v477, %v924
        %v926 = vpop.f32.mrb[0].mxu0
        %927 = vmatprep.mubr.bf16.mxu0 %v646
        %928 = vmatmul.mubr.bf16.gmra.mrb[0].mxu0 %v645
        %v929 = vpop.f32.mrb[0].mxu0
        %v930 = vadd.f32 %v477, %v929
        %v931 = vpop.f32.mrb[0].mxu0
        %v932 = vpop.f32.mrb[0].mxu0
        %v933 = vadd.f32 %v477, %v932
        %v934 = vpop.f32.mrb[0].mxu0
        %935 = vmatprep.mubr.bf16.mxu0 %v649
        %936 = vmatmul.mubr.bf16.gmra.mrb[0].mxu0 %v648
        %v937 = vpop.f32.mrb[0].mxu0
        %v938 = vadd.f32 %v477, %v937
        %v939 = vpop.f32.mrb[0].mxu0
        %v940 = vpop.f32.mrb[0].mxu0
        %v941 = vadd.f32 %v477, %v940
        %v942 = vpop.f32.mrb[0].mxu0
        %943 = vmatprep.mubr.bf16.mxu0 %v652
        %944 = vmatmul.mubr.bf16.gmra.mrb[0].mxu0 %v651
        %v945 = vpop.f32.mrb[0].mxu0
        %v946 = vadd.f32 %v477, %v945
        %v947 = vpop.f32.mrb[0].mxu0
        %v948 = vpop.f32.mrb[0].mxu0
        %v949 = vadd.f32 %v477, %v948
        %v950 = vpop.f32.mrb[0].mxu0
        %951 = vmatprep.mubr.bf16.mxu0 %v655
        %952 = vmatmul.mubr.bf16.gmra.mrb[0].mxu0 %v654
        %v953 = vpop.f32.mrb[0].mxu0
        %v954 = vadd.f32 %v477, %v953
        %v955 = vpop.f32.mrb[0].mxu0
        %v956 = vpop.f32.mrb[0].mxu0
        %v957 = vadd.f32 %v477, %v956
        %v958 = vpop.f32.mrb[0].mxu0
        %959 = vmatprep.mubr.bf16.mxu0 %v658
        %960 = vmatmul.mubr.bf16.gmra.mrb[0].mxu0 %v657
        %v961 = vpop.f32.mrb[0].mxu0
        %v962 = vadd.f32 %v477, %v961
        %v963 = vpop.f32.mrb[0].mxu0
        %v964 = vpop.f32.mrb[0].mxu0
        %v965 = vadd.f32 %v477, %v964
        %v966 = vpop.f32.mrb[0].mxu0
        %967 = vmatprep.mubr.bf16.mxu0 %v661
        %968 = vmatmul.mubr.bf16.gmra.mrb[0].mxu0 %v660
        %v969 = vpop.f32.mrb[0].mxu0
        %v970 = vadd.f32 %v477, %v969
        %v971 = vpop.f32.mrb[0].mxu0
        %v972 = vpop.f32.mrb[0].mxu0
        %v973 = vadd.f32 %v477, %v972
        %v974 = vpop.f32.mrb[0].mxu0
        %975 = vmatprep.mubr.bf16.mxu0 %v664
        %976 = vmatmul.mubr.bf16.gmra.mrb[0].mxu0 %v663
        %v977 = vpop.f32.mrb[0].mxu0
        %v978 = vadd.f32 %v477, %v977
        %v979 = vpop.f32.mrb[0].mxu0
        %v980 = vpop.f32.mrb[0].mxu0
        %v981 = vadd.f32 %v477, %v980
        %v982 = vpop.f32.mrb[0].mxu0
        %983 = vmatprep.mubr.bf16.mxu0 %v667
        %984 = vmatmul.mubr.bf16.gmra.mrb[0].mxu0 %v666
        %v985 = vpop.f32.mrb[0].mxu0
        %v986 = vadd.f32 %v477, %v985
        %v987 = vpop.f32.mrb[0].mxu0
        %v988 = vpop.f32.mrb[0].mxu0
        %v989 = vadd.f32 %v477, %v988
        %v990 = vpop.f32.mrb[0].mxu0
        %991 = vmatprep.mubr.bf16.mxu0 %v670
        %992 = vmatmul.mubr.bf16.gmra.mrb[0].mxu0 %v669
        %v993 = vpop.f32.mrb[0].mxu0
        %v994 = vadd.f32 %v477, %v993
        %v995 = vpop.f32.mrb[0].mxu0
        %v996 = vpop.f32.mrb[0].mxu0
        %v997 = vadd.f32 %v477, %v996
        %v998 = vpop.f32.mrb[0].mxu0
        %999 = vmatprep.mubr.bf16.mxu0 %v673
        %1000 = vmatmul.mubr.bf16.gmra.mrb[0].mxu0 %v672
        %v1001 = vpop.f32.mrb[0].mxu0
        %v1002 = vadd.f32 %v477, %v1001
        %v1003 = vpop.f32.mrb[0].mxu0
        %v1004 = vpop.f32.mrb[0].mxu0
        %v1005 = vadd.f32 %v477, %v1004
        %v1006 = vpop.f32.mrb[0].mxu0
        %1007 = vmatprep.mubr.bf16.mxu0 %v676
        %1008 = vmatmul.mubr.bf16.gmra.mrb[0].mxu0 %v675
        %v1009 = vpop.f32.mrb[0].mxu0
        %v1010 = vadd.f32 %v477, %v1009
        %v1011 = vpop.f32.mrb[0].mxu0
        %v1012 = vpop.f32.mrb[0].mxu0
        %v1013 = vadd.f32 %v477, %v1012
        %v1014 = vpop.f32.mrb[0].mxu0
        %1015 = vmatprep.mubr.bf16.mxu0 %v679
        %1016 = vmatmul.mubr.bf16.gmra.mrb[0].mxu0 %v678
        %v1017 = vpop.f32.mrb[0].mxu0
        %v1018 = vadd.f32 %v477, %v1017
        %v1019 = vpop.f32.mrb[0].mxu0
        %v1020 = vpop.f32.mrb[0].mxu0
        %v1021 = vadd.f32 %v477, %v1020
        %v1022 = vpop.f32.mrb[0].mxu0
        %1023 = vmatprep.mubr.bf16.mxu0 %v682
        %1024 = vmatmul.mubr.bf16.gmra.mrb[0].mxu0 %v681
        %v1025 = vpop.f32.mrb[0].mxu0
        %v1026 = vadd.f32 %v477, %v1025
        %v1027 = vpop.f32.mrb[0].mxu0
        %v1028 = vpop.f32.mrb[0].mxu0
        %v1029 = vadd.f32 %v477, %v1028
        %v1030 = vpop.f32.mrb[0].mxu0
        %1031 = vmatprep.mubr.bf16.mxu0 %v685
        %1032 = vmatmul.mubr.bf16.gmra.mrb[0].mxu0 %v684
        %v1033 = vpop.f32.mrb[0].mxu0
        %v1034 = vadd.f32 %v477, %v1033
        %v1035 = vpop.f32.mrb[0].mxu0
        %v1036 = vpop.f32.mrb[0].mxu0
        %v1037 = vadd.f32 %v477, %v1036
        %v1038 = vpop.f32.mrb[0].mxu0
        %1039 = vdwg.mxu0
        %1040 = vmatprep.subr.bf16.mxu0 0
        %1041 = vmatpush1.bf16.msra.mxu0 %v847
        %1042 = vmatprep.subr.bf16.mxu0 0
        %1043 = vmatpush1.bf16.msra.mxu0 %v848
        %1044 = vmatprep.subr.bf16.mxu0 0
        %1045 = vmatpush1.bf16.msra.mxu0 %v849
        %1046 = vmatprep.subr.bf16.mxu0 0
        %1047 = vmatpush1.bf16.msra.mxu0 %v850
        %1048 = vmatprep.subr.bf16.mxu0 0
        %1049 = vmatpush1.bf16.msra.mxu0 %v851
        %1050 = vmatprep.subr.bf16.mxu0 0
        %1051 = vmatpush1.bf16.msra.mxu0 %v852
        %1052 = vmatprep.subr.bf16.mxu0 0
        %1053 = vmatpush1.bf16.msra.mxu0 %v853
        %1054 = vmatprep.subr.bf16.mxu0 0
        %1055 = vmatpush1.bf16.msra.mxu0 %v854
        %1056 = vmatprep.subr.bf16.mxu0 0
        %1057 = vmatpush1.bf16.msra.mxu0 0
        %1058 = vmatprep.subr.bf16.mxu0 0
        %1059 = vmatpush1.bf16.msra.mxu0 0
        %1060 = vmatprep.subr.bf16.mxu0 0
        %1061 = vmatpush1.bf16.msra.mxu0 0
        %1062 = vmatprep.subr.bf16.mxu0 0
        %1063 = vmatpush1.bf16.msra.mxu0 0
        %1064 = vmatprep.subr.bf16.mxu0 0
        %1065 = vmatpush1.bf16.msra.mxu0 0
        %1066 = vmatprep.subr.bf16.mxu0 0
        %1067 = vmatpush1.bf16.msra.mxu0 0
        %1068 = vmatprep.subr.bf16.mxu0 0
        %1069 = vmatpush1.bf16.msra.mxu0 0
        %1070 = vmatprep.subr.bf16.mxu0 0
        %1071 = vmatpush1.bf16.msra.mxu0 0
        %1072 = vmatprep.mubr.bf16.mxu0 0
        %1073 = vmatmul.mubr.bf16.gmra.mrb[0].mxu0 %v641
        %v1074 = vpop.f32.mrb[0].mxu0
        %v1075 = vadd.f32 %v914, %v1074
        %v1076 = vpop.f32.mrb[0].mxu0
        %v1077 = vpop.f32.mrb[0].mxu0
        %v1078 = vadd.f32 %v917, %v1077
        %v1079 = vpop.f32.mrb[0].mxu0
        %1080 = vmatprep.mubr.bf16.mxu0 0
        %1081 = vmatmul.mubr.bf16.gmra.mrb[0].mxu0 %v644
        %v1082 = vpop.f32.mrb[0].mxu0
        %v1083 = vadd.f32 %v922, %v1082
        %v1084 = vpop.f32.mrb[0].mxu0
        %v1085 = vpop.f32.mrb[0].mxu0
        %v1086 = vadd.f32 %v925, %v1085
        %v1087 = vpop.f32.mrb[0].mxu0
        %1088 = vmatprep.mubr.bf16.mxu0 0
        %1089 = vmatmul.mubr.bf16.gmra.mrb[0].mxu0 %v647
        %v1090 = vpop.f32.mrb[0].mxu0
        %v1091 = vadd.f32 %v930, %v1090
        %v1092 = vpop.f32.mrb[0].mxu0
        %v1093 = vpop.f32.mrb[0].mxu0
        %v1094 = vadd.f32 %v933, %v1093
        %v1095 = vpop.f32.mrb[0].mxu0
        %1096 = vmatprep.mubr.bf16.mxu0 0
        %1097 = vmatmul.mubr.bf16.gmra.mrb[0].mxu0 %v650
        %v1098 = vpop.f32.mrb[0].mxu0
        %v1099 = vadd.f32 %v938, %v1098
        %v1100 = vpop.f32.mrb[0].mxu0
        %v1101 = vpop.f32.mrb[0].mxu0
        %v1102 = vadd.f32 %v941, %v1101
        %v1103 = vpop.f32.mrb[0].mxu0
        %1104 = vmatprep.mubr.bf16.mxu0 0
        %1105 = vmatmul.mubr.bf16.gmra.mrb[0].mxu0 %v653
        %v1106 = vpop.f32.mrb[0].mxu0
        %v1107 = vadd.f32 %v946, %v1106
        %v1108 = vpop.f32.mrb[0].mxu0
        %v1109 = vpop.f32.mrb[0].mxu0
        %v1110 = vadd.f32 %v949, %v1109
        %v1111 = vpop.f32.mrb[0].mxu0
        %1112 = vmatprep.mubr.bf16.mxu0 0
        %1113 = vmatmul.mubr.bf16.gmra.mrb[0].mxu0 %v656
        %v1114 = vpop.f32.mrb[0].mxu0
        %v1115 = vadd.f32 %v954, %v1114
        %v1116 = vpop.f32.mrb[0].mxu0
        %v1117 = vpop.f32.mrb[0].mxu0
        %v1118 = vadd.f32 %v957, %v1117
        %v1119 = vpop.f32.mrb[0].mxu0
        %1120 = vmatprep.mubr.bf16.mxu0 0
        %1121 = vmatmul.mubr.bf16.gmra.mrb[0].mxu0 %v659
        %v1122 = vpop.f32.mrb[0].mxu0
        %v1123 = vadd.f32 %v962, %v1122
        %v1124 = vpop.f32.mrb[0].mxu0
        %v1125 = vpop.f32.mrb[0].mxu0
        %v1126 = vadd.f32 %v965, %v1125
        %v1127 = vpop.f32.mrb[0].mxu0
        %1128 = vmatprep.mubr.bf16.mxu0 0
        %1129 = vmatmul.mubr.bf16.gmra.mrb[0].mxu0 %v662
        %v1130 = vpop.f32.mrb[0].mxu0
        %v1131 = vadd.f32 %v970, %v1130
        %v1132 = vpop.f32.mrb[0].mxu0
        %v1133 = vpop.f32.mrb[0].mxu0
        %v1134 = vadd.f32 %v973, %v1133
        %v1135 = vpop.f32.mrb[0].mxu0
        %1136 = vmatprep.mubr.bf16.mxu0 0
        %1137 = vmatmul.mubr.bf16.gmra.mrb[0].mxu0 %v665
        %v1138 = vpop.f32.mrb[0].mxu0
        %v1139 = vadd.f32 %v978, %v1138
        %v1140 = vpop.f32.mrb[0].mxu0
        %v1141 = vpop.f32.mrb[0].mxu0
        %v1142 = vadd.f32 %v981, %v1141
        %v1143 = vpop.f32.mrb[0].mxu0
        %1144 = vmatprep.mubr.bf16.mxu0 0
        %1145 = vmatmul.mubr.bf16.gmra.mrb[0].mxu0 %v668
        %v1146 = vpop.f32.mrb[0].mxu0
        %v1147 = vadd.f32 %v986, %v1146
        %v1148 = vpop.f32.mrb[0].mxu0
        %v1149 = vpop.f32.mrb[0].mxu0
        %v1150 = vadd.f32 %v989, %v1149
        %v1151 = vpop.f32.mrb[0].mxu0
        %1152 = vmatprep.mubr.bf16.mxu0 0
        %1153 = vmatmul.mubr.bf16.gmra.mrb[0].mxu0 %v671
        %v1154 = vpop.f32.mrb[0].mxu0
        %v1155 = vadd.f32 %v994, %v1154
        %v1156 = vpop.f32.mrb[0].mxu0
        %v1157 = vpop.f32.mrb[0].mxu0
        %v1158 = vadd.f32 %v997, %v1157
        %v1159 = vpop.f32.mrb[0].mxu0
        %1160 = vmatprep.mubr.bf16.mxu0 0
        %1161 = vmatmul.mubr.bf16.gmra.mrb[0].mxu0 %v674
        %v1162 = vpop.f32.mrb[0].mxu0
        %v1163 = vadd.f32 %v1002, %v1162
        %v1164 = vpop.f32.mrb[0].mxu0
        %v1165 = vpop.f32.mrb[0].mxu0
        %v1166 = vadd.f32 %v1005, %v1165
        %v1167 = vpop.f32.mrb[0].mxu0
        %1168 = vmatprep.mubr.bf16.mxu0 0
        %1169 = vmatmul.mubr.bf16.gmra.mrb[0].mxu0 %v677
        %v1170 = vpop.f32.mrb[0].mxu0
        %v1171 = vadd.f32 %v1010, %v1170
        %v1172 = vpop.f32.mrb[0].mxu0
        %v1173 = vpop.f32.mrb[0].mxu0
        %v1174 = vadd.f32 %v1013, %v1173
        %v1175 = vpop.f32.mrb[0].mxu0
        %1176 = vmatprep.mubr.bf16.mxu0 0
        %1177 = vmatmul.mubr.bf16.gmra.mrb[0].mxu0 %v680
        %v1178 = vpop.f32.mrb[0].mxu0
        %v1179 = vadd.f32 %v1018, %v1178
        %v1180 = vpop.f32.mrb[0].mxu0
        %v1181 = vpop.f32.mrb[0].mxu0
        %v1182 = vadd.f32 %v1021, %v1181
        %v1183 = vpop.f32.mrb[0].mxu0
        %1184 = vmatprep.mubr.bf16.mxu0 0
        %1185 = vmatmul.mubr.bf16.gmra.mrb[0].mxu0 %v683
        %v1186 = vpop.f32.mrb[0].mxu0
        %v1187 = vadd.f32 %v1026, %v1186
        %v1188 = vpop.f32.mrb[0].mxu0
        %v1189 = vpop.f32.mrb[0].mxu0
        %v1190 = vadd.f32 %v1029, %v1189
        %v1191 = vpop.f32.mrb[0].mxu0
        %1192 = vmatprep.mubr.bf16.mxu0 0
        %1193 = vmatmul.mubr.bf16.gmra.mrb[0].mxu0 %v686
        %v1194 = vpop.f32.mrb[0].mxu0
        %v1195 = vadd.f32 %v1034, %v1194
        %v1196 = vpop.f32.mrb[0].mxu0
        %v1197 = vpop.f32.mrb[0].mxu0
        %v1198 = vadd.f32 %v1037, %v1197
        %v1199 = vpop.f32.mrb[0].mxu0
        %1200 = vdwg.mxu0
        %v1201 = vxor.u32 %v1075, 2147483648
        %v1202 = vxor.u32 %v1078, 2147483648
        %v1203 = vxor.u32 %v1083, 2147483648
        %v1204 = vxor.u32 %v1086, 2147483648
        %v1205 = vxor.u32 %v1091, 2147483648
        %v1206 = vxor.u32 %v1094, 2147483648
        %v1207 = vxor.u32 %v1099, 2147483648
        %v1208 = vxor.u32 %v1102, 2147483648
        %v1209 = vxor.u32 %v1107, 2147483648
        %v1210 = vxor.u32 %v1110, 2147483648
        %v1211 = vxor.u32 %v1115, 2147483648
        %v1212 = vxor.u32 %v1118, 2147483648
        %v1213 = vxor.u32 %v1123, 2147483648
        %v1214 = vxor.u32 %v1126, 2147483648
        %v1215 = vxor.u32 %v1131, 2147483648
        %v1216 = vxor.u32 %v1134, 2147483648
        %v1217 = vxor.u32 %v1139, 2147483648
        %v1218 = vxor.u32 %v1142, 2147483648
        %v1219 = vxor.u32 %v1147, 2147483648
        %v1220 = vxor.u32 %v1150, 2147483648
        %v1221 = vxor.u32 %v1155, 2147483648
        %v1222 = vxor.u32 %v1158, 2147483648
        %v1223 = vxor.u32 %v1163, 2147483648
        %v1224 = vxor.u32 %v1166, 2147483648
        %v1225 = vxor.u32 %v1171, 2147483648
        %v1226 = vxor.u32 %v1174, 2147483648
        %v1227 = vxor.u32 %v1179, 2147483648
        %v1228 = vxor.u32 %v1182, 2147483648
        %v1229 = vxor.u32 %v1187, 2147483648
        %v1230 = vxor.u32 %v1190, 2147483648
        %v1231 = vxor.u32 %v1195, 2147483648
        %v1232 = vxor.u32 %v1198, 2147483648
        %v1233 = vmul.f32 %v1201, 1.442695
        %v1234 = vpow.pop %v1233
        %v1235 = vmul.f32 %v1202, 1.442695
        %v1236 = vpow.pop %v1235
        %v1237 = vmul.f32 %v1203, 1.442695
        %v1238 = vpow.pop %v1237
        %v1239 = vmul.f32 %v1204, 1.442695
        %v1240 = vpow.pop %v1239
        %v1241 = vmul.f32 %v1205, 1.442695
        %v1242 = vpow.pop %v1241
        %v1243 = vmul.f32 %v1206, 1.442695
        %v1244 = vpow.pop %v1243
        %v1245 = vmul.f32 %v1207, 1.442695
        %v1246 = vpow.pop %v1245
        %v1247 = vmul.f32 %v1208, 1.442695
        %v1248 = vpow.pop %v1247
        %v1249 = vmul.f32 %v1209, 1.442695
        %v1250 = vpow.pop %v1249
        %v1251 = vmul.f32 %v1210, 1.442695
        %v1252 = vpow.pop %v1251
        %v1253 = vmul.f32 %v1211, 1.442695
        %v1254 = vpow.pop %v1253
        %v1255 = vmul.f32 %v1212, 1.442695
        %v1256 = vpow.pop %v1255
        %v1257 = vmul.f32 %v1213, 1.442695
        %v1258 = vpow.pop %v1257
        %v1259 = vmul.f32 %v1214, 1.442695
        %v1260 = vpow.pop %v1259
        %v1261 = vmul.f32 %v1215, 1.442695
        %v1262 = vpow.pop %v1261
        %v1263 = vmul.f32 %v1216, 1.442695
        %v1264 = vpow.pop %v1263
        %v1265 = vmul.f32 %v1217, 1.442695
        %v1266 = vpow.pop %v1265
        %v1267 = vmul.f32 %v1218, 1.442695
        %v1268 = vpow.pop %v1267
        %v1269 = vmul.f32 %v1219, 1.442695
        %v1270 = vpow.pop %v1269
        %v1271 = vmul.f32 %v1220, 1.442695
        %v1272 = vpow.pop %v1271
        %v1273 = vmul.f32 %v1221, 1.442695
        %v1274 = vpow.pop %v1273
        %v1275 = vmul.f32 %v1222, 1.442695
        %v1276 = vpow.pop %v1275
        %v1277 = vmul.f32 %v1223, 1.442695
        %v1278 = vpow.pop %v1277
        %v1279 = vmul.f32 %v1224, 1.442695
        %v1280 = vpow.pop %v1279
        %v1281 = vmul.f32 %v1225, 1.442695
        %v1282 = vpow.pop %v1281
        %v1283 = vmul.f32 %v1226, 1.442695
        %v1284 = vpow.pop %v1283
        %v1285 = vmul.f32 %v1227, 1.442695
        %v1286 = vpow.pop %v1285
        %v1287 = vmul.f32 %v1228, 1.442695
        %v1288 = vpow.pop %v1287
        %v1289 = vmul.f32 %v1229, 1.442695
        %v1290 = vpow.pop %v1289
        %v1291 = vmul.f32 %v1230, 1.442695
        %v1292 = vpow.pop %v1291
        %v1293 = vmul.f32 %v1231, 1.442695
        %v1294 = vpow.pop %v1293
        %v1295 = vmul.f32 %v1232, 1.442695
        %v1296 = vpow.pop %v1295
        %v1297 = vadd.f32 %v1234, 1.0
        %v1298 = vadd.f32 %v1236, 1.0
        %v1299 = vadd.f32 %v1238, 1.0
        %v1300 = vadd.f32 %v1240, 1.0
        %v1301 = vadd.f32 %v1242, 1.0
        %v1302 = vadd.f32 %v1244, 1.0
        %v1303 = vadd.f32 %v1246, 1.0
        %v1304 = vadd.f32 %v1248, 1.0
        %v1305 = vadd.f32 %v1250, 1.0
        %v1306 = vadd.f32 %v1252, 1.0
        %v1307 = vadd.f32 %v1254, 1.0
        %v1308 = vadd.f32 %v1256, 1.0
        %v1309 = vadd.f32 %v1258, 1.0
        %v1310 = vadd.f32 %v1260, 1.0
        %v1311 = vadd.f32 %v1262, 1.0
        %v1312 = vadd.f32 %v1264, 1.0
        %v1313 = vadd.f32 %v1266, 1.0
        %v1314 = vadd.f32 %v1268, 1.0
        %v1315 = vadd.f32 %v1270, 1.0
        %v1316 = vadd.f32 %v1272, 1.0
        %v1317 = vadd.f32 %v1274, 1.0
        %v1318 = vadd.f32 %v1276, 1.0
        %v1319 = vadd.f32 %v1278, 1.0
        %v1320 = vadd.f32 %v1280, 1.0
        %v1321 = vadd.f32 %v1282, 1.0
        %v1322 = vadd.f32 %v1284, 1.0
        %v1323 = vadd.f32 %v1286, 1.0
        %v1324 = vadd.f32 %v1288, 1.0
        %v1325 = vadd.f32 %v1290, 1.0
        %v1326 = vadd.f32 %v1292, 1.0
        %v1327 = vadd.f32 %v1294, 1.0
        %v1328 = vadd.f32 %v1296, 1.0
        %v1329 = vrcp.pop %v1297
        %v1330 = vmul.f32 1.0, %v1329
        %v1331 = vrcp.pop %v1298
        %v1332 = vmul.f32 1.0, %v1331
        %v1333 = vrcp.pop %v1299
        %v1334 = vmul.f32 1.0, %v1333
        %v1335 = vrcp.pop %v1300
        %v1336 = vmul.f32 1.0, %v1335
        %v1337 = vrcp.pop %v1301
        %v1338 = vmul.f32 1.0, %v1337
        %v1339 = vrcp.pop %v1302
        %v1340 = vmul.f32 1.0, %v1339
        %v1341 = vrcp.pop %v1303
        %v1342 = vmul.f32 1.0, %v1341
        %v1343 = vrcp.pop %v1304
        %v1344 = vmul.f32 1.0, %v1343
        %v1345 = vrcp.pop %v1305
        %v1346 = vmul.f32 1.0, %v1345
        %v1347 = vrcp.pop %v1306
        %v1348 = vmul.f32 1.0, %v1347
        %v1349 = vrcp.pop %v1307
        %v1350 = vmul.f32 1.0, %v1349
        %v1351 = vrcp.pop %v1308
        %v1352 = vmul.f32 1.0, %v1351
        %v1353 = vrcp.pop %v1309
        %v1354 = vmul.f32 1.0, %v1353
        %v1355 = vrcp.pop %v1310
        %v1356 = vmul.f32 1.0, %v1355
        %v1357 = vrcp.pop %v1311
        %v1358 = vmul.f32 1.0, %v1357
        %v1359 = vrcp.pop %v1312
        %v1360 = vmul.f32 1.0, %v1359
        %v1361 = vrcp.pop %v1313
        %v1362 = vmul.f32 1.0, %v1361
        %v1363 = vrcp.pop %v1314
        %v1364 = vmul.f32 1.0, %v1363
        %v1365 = vrcp.pop %v1315
        %v1366 = vmul.f32 1.0, %v1365
        %v1367 = vrcp.pop %v1316
        %v1368 = vmul.f32 1.0, %v1367
        %v1369 = vrcp.pop %v1317
        %v1370 = vmul.f32 1.0, %v1369
        %v1371 = vrcp.pop %v1318
        %v1372 = vmul.f32 1.0, %v1371
        %v1373 = vrcp.pop %v1319
        %v1374 = vmul.f32 1.0, %v1373
        %v1375 = vrcp.pop %v1320
        %v1376 = vmul.f32 1.0, %v1375
        %v1377 = vrcp.pop %v1321
        %v1378 = vmul.f32 1.0, %v1377
        %v1379 = vrcp.pop %v1322
        %v1380 = vmul.f32 1.0, %v1379
        %v1381 = vrcp.pop %v1323
        %v1382 = vmul.f32 1.0, %v1381
        %v1383 = vrcp.pop %v1324
        %v1384 = vmul.f32 1.0, %v1383
        %v1385 = vrcp.pop %v1325
        %v1386 = vmul.f32 1.0, %v1385
        %v1387 = vrcp.pop %v1326
        %v1388 = vmul.f32 1.0, %v1387
        %v1389 = vrcp.pop %v1327
        %v1390 = vmul.f32 1.0, %v1389
        %v1391 = vrcp.pop %v1328
        %v1392 = vmul.f32 1.0, %v1391
        %v1393 = vtanh.pop %v1075
        %v1394 = vtanh.pop %v1078
        %v1395 = vtanh.pop %v1083
        %v1396 = vtanh.pop %v1086
        %v1397 = vtanh.pop %v1091
        %v1398 = vtanh.pop %v1094
        %v1399 = vtanh.pop %v1099
        %v1400 = vtanh.pop %v1102
        %v1401 = vtanh.pop %v1107
        %v1402 = vtanh.pop %v1110
        %v1403 = vtanh.pop %v1115
        %v1404 = vtanh.pop %v1118
        %v1405 = vtanh.pop %v1123
        %v1406 = vtanh.pop %v1126
        %v1407 = vtanh.pop %v1131
        %v1408 = vtanh.pop %v1134
        %v1409 = vtanh.pop %v1139
        %v1410 = vtanh.pop %v1142
        %v1411 = vtanh.pop %v1147
        %v1412 = vtanh.pop %v1150
        %v1413 = vtanh.pop %v1155
        %v1414 = vtanh.pop %v1158
        %v1415 = vtanh.pop %v1163
        %v1416 = vtanh.pop %v1166
        %v1417 = vtanh.pop %v1171
        %v1418 = vtanh.pop %v1174
        %v1419 = vtanh.pop %v1179
        %v1420 = vtanh.pop %v1182
        %v1421 = vtanh.pop %v1187
        %v1422 = vtanh.pop %v1190
        %v1423 = vtanh.pop %v1195
        %v1424 = vtanh.pop %v1198
        %v1425 = vld [vmem:[%s344] sm:$0xff]
        %v1426 = vld [vmem:[%s344 + $0x8] sm:$0xff]
        %v1427 = vld [vmem:[%s344 + $0x10] sm:$0xff]
        %v1428 = vld [vmem:[%s344 + $0x18] sm:$0xff]
        %v1429 = vld [vmem:[%s344 + $0x20] sm:$0xff]
        %v1430 = vld [vmem:[%s344 + $0x28] sm:$0xff]
        %v1431 = vld [vmem:[%s344 + $0x30] sm:$0xff]
        %v1432 = vld [vmem:[%s344 + $0x38] sm:$0xff]
        %v1433 = vld [vmem:[%s344 + $0x40] sm:$0xff]
        %v1434 = vld [vmem:[%s344 + $0x48] sm:$0xff]
        %v1435 = vld [vmem:[%s344 + $0x50] sm:$0xff]
        %v1436 = vld [vmem:[%s344 + $0x58] sm:$0xff]
        %v1437 = vld [vmem:[%s344 + $0x60] sm:$0xff]
        %v1438 = vld [vmem:[%s344 + $0x68] sm:$0xff]
        %v1439 = vld [vmem:[%s344 + $0x70] sm:$0xff]
        %v1440 = vld [vmem:[%s344 + $0x78] sm:$0xff]
        %v1441 = vld [vmem:[%s344 + $0x80] sm:$0xff]
        %v1442 = vld [vmem:[%s344 + $0x88] sm:$0xff]
        %v1443 = vld [vmem:[%s344 + $0x90] sm:$0xff]
        %v1444 = vld [vmem:[%s344 + $0x98] sm:$0xff]
        %v1445 = vld [vmem:[%s344 + $0xa0] sm:$0xff]
        %v1446 = vld [vmem:[%s344 + $0xa8] sm:$0xff]
        %v1447 = vld [vmem:[%s344 + $0xb0] sm:$0xff]
        %v1448 = vld [vmem:[%s344 + $0xb8] sm:$0xff]
        %v1449 = vld [vmem:[%s344 + $0xc0] sm:$0xff]
        %v1450 = vld [vmem:[%s344 + $0xc8] sm:$0xff]
        %v1451 = vld [vmem:[%s344 + $0xd0] sm:$0xff]
        %v1452 = vld [vmem:[%s344 + $0xd8] sm:$0xff]
        %v1453 = vld [vmem:[%s344 + $0xe0] sm:$0xff]
        %v1454 = vld [vmem:[%s344 + $0xe8] sm:$0xff]
        %v1455 = vld [vmem:[%s344 + $0xf0] sm:$0xff]
        %v1456 = vld [vmem:[%s344 + $0xf8] sm:$0xff]
        %1489 = vrot.lane.b32.xlu0 %v1425, 32
        %v1490 = vpop.permute.xlu0 %1489
        %1491 = vrot.lane.b32.xlu0 %v1426, 32
        %v1492 = vpop.permute.xlu0 %1491
        %1493 = vrot.lane.b32.xlu0 %v1427, 32
        %v1494 = vpop.permute.xlu0 %1493
        %1495 = vrot.lane.b32.xlu0 %v1428, 32
        %v1496 = vpop.permute.xlu0 %1495
        %1497 = vrot.lane.b32.xlu0 %v1429, 32
        %v1498 = vpop.permute.xlu0 %1497
        %1499 = vrot.lane.b32.xlu0 %v1430, 32
        %v1500 = vpop.permute.xlu0 %1499
        %1501 = vrot.lane.b32.xlu0 %v1431, 32
        %v1502 = vpop.permute.xlu0 %1501
        %1503 = vrot.lane.b32.xlu0 %v1432, 32
        %v1504 = vpop.permute.xlu0 %1503
        %1505 = vrot.lane.b32.xlu0 %v1433, 32
        %v1506 = vpop.permute.xlu0 %1505
        %1507 = vrot.lane.b32.xlu0 %v1434, 32
        %v1508 = vpop.permute.xlu0 %1507
        %1509 = vrot.lane.b32.xlu0 %v1435, 32
        %v1510 = vpop.permute.xlu0 %1509
        %1511 = vrot.lane.b32.xlu0 %v1436, 32
        %v1512 = vpop.permute.xlu0 %1511
        %1513 = vrot.lane.b32.xlu0 %v1437, 32
        %v1514 = vpop.permute.xlu0 %1513
        %1515 = vrot.lane.b32.xlu0 %v1438, 32
        %v1516 = vpop.permute.xlu0 %1515
        %1517 = vrot.lane.b32.xlu0 %v1439, 32
        %v1518 = vpop.permute.xlu0 %1517
        %1519 = vrot.lane.b32.xlu0 %v1440, 32
        %v1520 = vpop.permute.xlu0 %1519
        %1521 = vrot.lane.b32.xlu0 %v1441, 32
        %v1522 = vpop.permute.xlu0 %1521
        %1523 = vrot.lane.b32.xlu0 %v1442, 32
        %v1524 = vpop.permute.xlu0 %1523
        %1525 = vrot.lane.b32.xlu0 %v1443, 32
        %v1526 = vpop.permute.xlu0 %1525
        %1527 = vrot.lane.b32.xlu0 %v1444, 32
        %v1528 = vpop.permute.xlu0 %1527
        %1529 = vrot.lane.b32.xlu0 %v1445, 32
        %v1530 = vpop.permute.xlu0 %1529
        %1531 = vrot.lane.b32.xlu0 %v1446, 32
        %v1532 = vpop.permute.xlu0 %1531
        %1533 = vrot.lane.b32.xlu0 %v1447, 32
        %v1534 = vpop.permute.xlu0 %1533
        %1535 = vrot.lane.b32.xlu0 %v1448, 32
        %v1536 = vpop.permute.xlu0 %1535
        %1537 = vrot.lane.b32.xlu0 %v1449, 32
        %v1538 = vpop.permute.xlu0 %1537
        %1539 = vrot.lane.b32.xlu0 %v1450, 32
        %v1540 = vpop.permute.xlu0 %1539
        %1541 = vrot.lane.b32.xlu0 %v1451, 32
        %v1542 = vpop.permute.xlu0 %1541
        %1543 = vrot.lane.b32.xlu0 %v1452, 32
        %v1544 = vpop.permute.xlu0 %1543
        %1545 = vrot.lane.b32.xlu0 %v1453, 32
        %v1546 = vpop.permute.xlu0 %1545
        %1547 = vrot.lane.b32.xlu0 %v1454, 32
        %v1548 = vpop.permute.xlu0 %1547
        %1549 = vrot.lane.b32.xlu0 %v1455, 32
        %v1550 = vpop.permute.xlu0 %1549
        %1551 = vrot.lane.b32.xlu0 %v1456, 32
        %v1552 = vpop.permute.xlu0 %1551
        %v1585 = vmul.f32 %v1330, %v1490
        %v1586 = vmul.f32 %v1332, %v1492
        %v1587 = vmul.f32 %v1334, %v1494
        %v1588 = vmul.f32 %v1336, %v1496
        %v1589 = vmul.f32 %v1338, %v1498
        %v1590 = vmul.f32 %v1340, %v1500
        %v1591 = vmul.f32 %v1342, %v1502
        %v1592 = vmul.f32 %v1344, %v1504
        %v1593 = vmul.f32 %v1346, %v1506
        %v1594 = vmul.f32 %v1348, %v1508
        %v1595 = vmul.f32 %v1350, %v1510
        %v1596 = vmul.f32 %v1352, %v1512
        %v1597 = vmul.f32 %v1354, %v1514
        %v1598 = vmul.f32 %v1356, %v1516
        %v1599 = vmul.f32 %v1358, %v1518
        %v1600 = vmul.f32 %v1360, %v1520
        %v1601 = vmul.f32 %v1362, %v1522
        %v1602 = vmul.f32 %v1364, %v1524
        %v1603 = vmul.f32 %v1366, %v1526
        %v1604 = vmul.f32 %v1368, %v1528
        %v1605 = vmul.f32 %v1370, %v1530
        %v1606 = vmul.f32 %v1372, %v1532
        %v1607 = vmul.f32 %v1374, %v1534
        %v1608 = vmul.f32 %v1376, %v1536
        %v1609 = vmul.f32 %v1378, %v1538
        %v1610 = vmul.f32 %v1380, %v1540
        %v1611 = vmul.f32 %v1382, %v1542
        %v1612 = vmul.f32 %v1384, %v1544
        %v1613 = vmul.f32 %v1386, %v1546
        %v1614 = vmul.f32 %v1388, %v1548
        %v1615 = vmul.f32 %v1390, %v1550
        %v1616 = vmul.f32 %v1392, %v1552
        %1649 = vrot.lane.b32.xlu0 %v1393, 64
        %v1650 = vpop.permute.xlu0 %1649
        %1651 = vrot.lane.b32.xlu0 %v1394, 64
        %v1652 = vpop.permute.xlu0 %1651
        %1653 = vrot.lane.b32.xlu0 %v1395, 64
        %v1654 = vpop.permute.xlu0 %1653
        %1655 = vrot.lane.b32.xlu0 %v1396, 64
        %v1656 = vpop.permute.xlu0 %1655
        %1657 = vrot.lane.b32.xlu0 %v1397, 64
        %v1658 = vpop.permute.xlu0 %1657
        %1659 = vrot.lane.b32.xlu0 %v1398, 64
        %v1660 = vpop.permute.xlu0 %1659
        %1661 = vrot.lane.b32.xlu0 %v1399, 64
        %v1662 = vpop.permute.xlu0 %1661
        %1663 = vrot.lane.b32.xlu0 %v1400, 64
        %v1664 = vpop.permute.xlu0 %1663
        %1665 = vrot.lane.b32.xlu0 %v1401, 64
        %v1666 = vpop.permute.xlu0 %1665
        %1667 = vrot.lane.b32.xlu0 %v1402, 64
        %v1668 = vpop.permute.xlu0 %1667
        %1669 = vrot.lane.b32.xlu0 %v1403, 64
        %v1670 = vpop.permute.xlu0 %1669
        %1671 = vrot.lane.b32.xlu0 %v1404, 64
        %v1672 = vpop.permute.xlu0 %1671
        %1673 = vrot.lane.b32.xlu0 %v1405, 64
        %v1674 = vpop.permute.xlu0 %1673
        %1675 = vrot.lane.b32.xlu0 %v1406, 64
        %v1676 = vpop.permute.xlu0 %1675
        %1677 = vrot.lane.b32.xlu0 %v1407, 64
        %v1678 = vpop.permute.xlu0 %1677
        %1679 = vrot.lane.b32.xlu0 %v1408, 64
        %v1680 = vpop.permute.xlu0 %1679
        %1681 = vrot.lane.b32.xlu0 %v1409, 64
        %v1682 = vpop.permute.xlu0 %1681
        %1683 = vrot.lane.b32.xlu0 %v1410, 64
        %v1684 = vpop.permute.xlu0 %1683
        %1685 = vrot.lane.b32.xlu0 %v1411, 64
        %v1686 = vpop.permute.xlu0 %1685
        %1687 = vrot.lane.b32.xlu0 %v1412, 64
        %v1688 = vpop.permute.xlu0 %1687
        %1689 = vrot.lane.b32.xlu0 %v1413, 64
        %v1690 = vpop.permute.xlu0 %1689
        %1691 = vrot.lane.b32.xlu0 %v1414, 64
        %v1692 = vpop.permute.xlu0 %1691
        %1693 = vrot.lane.b32.xlu0 %v1415, 64
        %v1694 = vpop.permute.xlu0 %1693
        %1695 = vrot.lane.b32.xlu0 %v1416, 64
        %v1696 = vpop.permute.xlu0 %1695
        %1697 = vrot.lane.b32.xlu0 %v1417, 64
        %v1698 = vpop.permute.xlu0 %1697
        %1699 = vrot.lane.b32.xlu0 %v1418, 64
        %v1700 = vpop.permute.xlu0 %1699
        %1701 = vrot.lane.b32.xlu0 %v1419, 64
        %v1702 = vpop.permute.xlu0 %1701
        %1703 = vrot.lane.b32.xlu0 %v1420, 64
        %v1704 = vpop.permute.xlu0 %1703
        %1705 = vrot.lane.b32.xlu0 %v1421, 64
        %v1706 = vpop.permute.xlu0 %1705
        %1707 = vrot.lane.b32.xlu0 %v1422, 64
        %v1708 = vpop.permute.xlu0 %1707
        %1709 = vrot.lane.b32.xlu0 %v1423, 64
        %v1710 = vpop.permute.xlu0 %1709
        %1711 = vrot.lane.b32.xlu0 %v1424, 64
        %v1712 = vpop.permute.xlu0 %1711
        %v1745 = vmul.f32 %v1330, %v1650
        %v1746 = vmul.f32 %v1332, %v1652
        %v1747 = vmul.f32 %v1334, %v1654
        %v1748 = vmul.f32 %v1336, %v1656
        %v1749 = vmul.f32 %v1338, %v1658
        %v1750 = vmul.f32 %v1340, %v1660
        %v1751 = vmul.f32 %v1342, %v1662
        %v1752 = vmul.f32 %v1344, %v1664
        %v1753 = vmul.f32 %v1346, %v1666
        %v1754 = vmul.f32 %v1348, %v1668
        %v1755 = vmul.f32 %v1350, %v1670
        %v1756 = vmul.f32 %v1352, %v1672
        %v1757 = vmul.f32 %v1354, %v1674
        %v1758 = vmul.f32 %v1356, %v1676
        %v1759 = vmul.f32 %v1358, %v1678
        %v1760 = vmul.f32 %v1360, %v1680
        %v1761 = vmul.f32 %v1362, %v1682
        %v1762 = vmul.f32 %v1364, %v1684
        %v1763 = vmul.f32 %v1366, %v1686
        %v1764 = vmul.f32 %v1368, %v1688
        %v1765 = vmul.f32 %v1370, %v1690
        %v1766 = vmul.f32 %v1372, %v1692
        %v1767 = vmul.f32 %v1374, %v1694
        %v1768 = vmul.f32 %v1376, %v1696
        %v1769 = vmul.f32 %v1378, %v1698
        %v1770 = vmul.f32 %v1380, %v1700
        %v1771 = vmul.f32 %v1382, %v1702
        %v1772 = vmul.f32 %v1384, %v1704
        %v1773 = vmul.f32 %v1386, %v1706
        %v1774 = vmul.f32 %v1388, %v1708
        %v1775 = vmul.f32 %v1390, %v1710
        %v1776 = vmul.f32 %v1392, %v1712
        %1809 = vrot.lane.b32.xlu0 %v1745, 32
        %v1810 = vpop.permute.xlu0 %1809
        %1811 = vrot.lane.b32.xlu0 %v1746, 32
        %v1812 = vpop.permute.xlu0 %1811
        %1813 = vrot.lane.b32.xlu0 %v1747, 32
        %v1814 = vpop.permute.xlu0 %1813
        %1815 = vrot.lane.b32.xlu0 %v1748, 32
        %v1816 = vpop.permute.xlu0 %1815
        %1817 = vrot.lane.b32.xlu0 %v1749, 32
        %v1818 = vpop.permute.xlu0 %1817
        %1819 = vrot.lane.b32.xlu0 %v1750, 32
        %v1820 = vpop.permute.xlu0 %1819
        %1821 = vrot.lane.b32.xlu0 %v1751, 32
        %v1822 = vpop.permute.xlu0 %1821
        %1823 = vrot.lane.b32.xlu0 %v1752, 32
        %v1824 = vpop.permute.xlu0 %1823
        %1825 = vrot.lane.b32.xlu0 %v1753, 32
        %v1826 = vpop.permute.xlu0 %1825
        %1827 = vrot.lane.b32.xlu0 %v1754, 32
        %v1828 = vpop.permute.xlu0 %1827
        %1829 = vrot.lane.b32.xlu0 %v1755, 32
        %v1830 = vpop.permute.xlu0 %1829
        %1831 = vrot.lane.b32.xlu0 %v1756, 32
        %v1832 = vpop.permute.xlu0 %1831
        %1833 = vrot.lane.b32.xlu0 %v1757, 32
        %v1834 = vpop.permute.xlu0 %1833
        %1835 = vrot.lane.b32.xlu0 %v1758, 32
        %v1836 = vpop.permute.xlu0 %1835
        %1837 = vrot.lane.b32.xlu0 %v1759, 32
        %v1838 = vpop.permute.xlu0 %1837
        %1839 = vrot.lane.b32.xlu0 %v1760, 32
        %v1840 = vpop.permute.xlu0 %1839
        %1841 = vrot.lane.b32.xlu0 %v1761, 32
        %v1842 = vpop.permute.xlu0 %1841
        %1843 = vrot.lane.b32.xlu0 %v1762, 32
        %v1844 = vpop.permute.xlu0 %1843
        %1845 = vrot.lane.b32.xlu0 %v1763, 32
        %v1846 = vpop.permute.xlu0 %1845
        %1847 = vrot.lane.b32.xlu0 %v1764, 32
        %v1848 = vpop.permute.xlu0 %1847
        %1849 = vrot.lane.b32.xlu0 %v1765, 32
        %v1850 = vpop.permute.xlu0 %1849
        %1851 = vrot.lane.b32.xlu0 %v1766, 32
        %v1852 = vpop.permute.xlu0 %1851
        %1853 = vrot.lane.b32.xlu0 %v1767, 32
        %v1854 = vpop.permute.xlu0 %1853
        %1855 = vrot.lane.b32.xlu0 %v1768, 32
        %v1856 = vpop.permute.xlu0 %1855
        %1857 = vrot.lane.b32.xlu0 %v1769, 32
        %v1858 = vpop.permute.xlu0 %1857
        %1859 = vrot.lane.b32.xlu0 %v1770, 32
        %v1860 = vpop.permute.xlu0 %1859
        %1861 = vrot.lane.b32.xlu0 %v1771, 32
        %v1862 = vpop.permute.xlu0 %1861
        %1863 = vrot.lane.b32.xlu0 %v1772, 32
        %v1864 = vpop.permute.xlu0 %1863
        %1865 = vrot.lane.b32.xlu0 %v1773, 32
        %v1866 = vpop.permute.xlu0 %1865
        %1867 = vrot.lane.b32.xlu0 %v1774, 32
        %v1868 = vpop.permute.xlu0 %1867
        %1869 = vrot.lane.b32.xlu0 %v1775, 32
        %v1870 = vpop.permute.xlu0 %1869
        %1871 = vrot.lane.b32.xlu0 %v1776, 32
        %v1872 = vpop.permute.xlu0 %1871
        %v1905 = vadd.f32 %v1585, %v1810
        %v1906 = vadd.f32 %v1586, %v1812
        %v1907 = vadd.f32 %v1587, %v1814
        %v1908 = vadd.f32 %v1588, %v1816
        %v1909 = vadd.f32 %v1589, %v1818
        %v1910 = vadd.f32 %v1590, %v1820
        %v1911 = vadd.f32 %v1591, %v1822
        %v1912 = vadd.f32 %v1592, %v1824
        %v1913 = vadd.f32 %v1593, %v1826
        %v1914 = vadd.f32 %v1594, %v1828
        %v1915 = vadd.f32 %v1595, %v1830
        %v1916 = vadd.f32 %v1596, %v1832
        %v1917 = vadd.f32 %v1597, %v1834
        %v1918 = vadd.f32 %v1598, %v1836
        %v1919 = vadd.f32 %v1599, %v1838
        %v1920 = vadd.f32 %v1600, %v1840
        %v1921 = vadd.f32 %v1601, %v1842
        %v1922 = vadd.f32 %v1602, %v1844
        %v1923 = vadd.f32 %v1603, %v1846
        %v1924 = vadd.f32 %v1604, %v1848
        %v1925 = vadd.f32 %v1605, %v1850
        %v1926 = vadd.f32 %v1606, %v1852
        %v1927 = vadd.f32 %v1607, %v1854
        %v1928 = vadd.f32 %v1608, %v1856
        %v1929 = vadd.f32 %v1609, %v1858
        %v1930 = vadd.f32 %v1610, %v1860
        %v1931 = vadd.f32 %v1611, %v1862
        %v1932 = vadd.f32 %v1612, %v1864
        %v1933 = vadd.f32 %v1613, %v1866
        %v1934 = vadd.f32 %v1614, %v1868
        %v1935 = vadd.f32 %v1615, %v1870
        %v1936 = vadd.f32 %v1616, %v1872
        %v1937 = vtanh.pop %v1905
        %v1938 = vtanh.pop %v1906
        %v1939 = vtanh.pop %v1907
        %v1940 = vtanh.pop %v1908
        %v1941 = vtanh.pop %v1909
        %v1942 = vtanh.pop %v1910
        %v1943 = vtanh.pop %v1911
        %v1944 = vtanh.pop %v1912
        %v1945 = vtanh.pop %v1913
        %v1946 = vtanh.pop %v1914
        %v1947 = vtanh.pop %v1915
        %v1948 = vtanh.pop %v1916
        %v1949 = vtanh.pop %v1917
        %v1950 = vtanh.pop %v1918
        %v1951 = vtanh.pop %v1919
        %v1952 = vtanh.pop %v1920
        %v1953 = vtanh.pop %v1921
        %v1954 = vtanh.pop %v1922
        %v1955 = vtanh.pop %v1923
        %v1956 = vtanh.pop %v1924
        %v1957 = vtanh.pop %v1925
        %v1958 = vtanh.pop %v1926
        %v1959 = vtanh.pop %v1927
        %v1960 = vtanh.pop %v1928
        %v1961 = vtanh.pop %v1929
        %v1962 = vtanh.pop %v1930
        %v1963 = vtanh.pop %v1931
        %v1964 = vtanh.pop %v1932
        %v1965 = vtanh.pop %v1933
        %v1966 = vtanh.pop %v1934
        %v1967 = vtanh.pop %v1935
        %v1968 = vtanh.pop %v1936
        %2001 = vrot.lane.b32.xlu0 %v1937, 64
        %v2002 = vpop.permute.xlu0 %2001
        %2003 = vrot.lane.b32.xlu0 %v1938, 64
        %v2004 = vpop.permute.xlu0 %2003
        %2005 = vrot.lane.b32.xlu0 %v1939, 64
        %v2006 = vpop.permute.xlu0 %2005
        %2007 = vrot.lane.b32.xlu0 %v1940, 64
        %v2008 = vpop.permute.xlu0 %2007
        %2009 = vrot.lane.b32.xlu0 %v1941, 64
        %v2010 = vpop.permute.xlu0 %2009
        %2011 = vrot.lane.b32.xlu0 %v1942, 64
        %v2012 = vpop.permute.xlu0 %2011
        %2013 = vrot.lane.b32.xlu0 %v1943, 64
        %v2014 = vpop.permute.xlu0 %2013
        %2015 = vrot.lane.b32.xlu0 %v1944, 64
        %v2016 = vpop.permute.xlu0 %2015
        %2017 = vrot.lane.b32.xlu0 %v1945, 64
        %v2018 = vpop.permute.xlu0 %2017
        %2019 = vrot.lane.b32.xlu0 %v1946, 64
        %v2020 = vpop.permute.xlu0 %2019
        %2021 = vrot.lane.b32.xlu0 %v1947, 64
        %v2022 = vpop.permute.xlu0 %2021
        %2023 = vrot.lane.b32.xlu0 %v1948, 64
        %v2024 = vpop.permute.xlu0 %2023
        %2025 = vrot.lane.b32.xlu0 %v1949, 64
        %v2026 = vpop.permute.xlu0 %2025
        %2027 = vrot.lane.b32.xlu0 %v1950, 64
        %v2028 = vpop.permute.xlu0 %2027
        %2029 = vrot.lane.b32.xlu0 %v1951, 64
        %v2030 = vpop.permute.xlu0 %2029
        %2031 = vrot.lane.b32.xlu0 %v1952, 64
        %v2032 = vpop.permute.xlu0 %2031
        %2033 = vrot.lane.b32.xlu0 %v1953, 64
        %v2034 = vpop.permute.xlu0 %2033
        %2035 = vrot.lane.b32.xlu0 %v1954, 64
        %v2036 = vpop.permute.xlu0 %2035
        %2037 = vrot.lane.b32.xlu0 %v1955, 64
        %v2038 = vpop.permute.xlu0 %2037
        %2039 = vrot.lane.b32.xlu0 %v1956, 64
        %v2040 = vpop.permute.xlu0 %2039
        %2041 = vrot.lane.b32.xlu0 %v1957, 64
        %v2042 = vpop.permute.xlu0 %2041
        %2043 = vrot.lane.b32.xlu0 %v1958, 64
        %v2044 = vpop.permute.xlu0 %2043
        %2045 = vrot.lane.b32.xlu0 %v1959, 64
        %v2046 = vpop.permute.xlu0 %2045
        %2047 = vrot.lane.b32.xlu0 %v1960, 64
        %v2048 = vpop.permute.xlu0 %2047
        %2049 = vrot.lane.b32.xlu0 %v1961, 64
        %v2050 = vpop.permute.xlu0 %2049
        %2051 = vrot.lane.b32.xlu0 %v1962, 64
        %v2052 = vpop.permute.xlu0 %2051
        %2053 = vrot.lane.b32.xlu0 %v1963, 64
        %v2054 = vpop.permute.xlu0 %2053
        %2055 = vrot.lane.b32.xlu0 %v1964, 64
        %v2056 = vpop.permute.xlu0 %2055
        %2057 = vrot.lane.b32.xlu0 %v1965, 64
        %v2058 = vpop.permute.xlu0 %2057
        %2059 = vrot.lane.b32.xlu0 %v1966, 64
        %v2060 = vpop.permute.xlu0 %2059
        %2061 = vrot.lane.b32.xlu0 %v1967, 64
        %v2062 = vpop.permute.xlu0 %2061
        %2063 = vrot.lane.b32.xlu0 %v1968, 64
        %v2064 = vpop.permute.xlu0 %2063
        %v2097 = vmul.f32 %v1330, %v2002
        %v2098 = vmul.f32 %v1332, %v2004
        %v2099 = vmul.f32 %v1334, %v2006
        %v2100 = vmul.f32 %v1336, %v2008
        %v2101 = vmul.f32 %v1338, %v2010
        %v2102 = vmul.f32 %v1340, %v2012
        %v2103 = vmul.f32 %v1342, %v2014
        %v2104 = vmul.f32 %v1344, %v2016
        %v2105 = vmul.f32 %v1346, %v2018
        %v2106 = vmul.f32 %v1348, %v2020
        %v2107 = vmul.f32 %v1350, %v2022
        %v2108 = vmul.f32 %v1352, %v2024
        %v2109 = vmul.f32 %v1354, %v2026
        %v2110 = vmul.f32 %v1356, %v2028
        %v2111 = vmul.f32 %v1358, %v2030
        %v2112 = vmul.f32 %v1360, %v2032
        %v2113 = vmul.f32 %v1362, %v2034
        %v2114 = vmul.f32 %v1364, %v2036
        %v2115 = vmul.f32 %v1366, %v2038
        %v2116 = vmul.f32 %v1368, %v2040
        %v2117 = vmul.f32 %v1370, %v2042
        %v2118 = vmul.f32 %v1372, %v2044
        %v2119 = vmul.f32 %v1374, %v2046
        %v2120 = vmul.f32 %v1376, %v2048
        %v2121 = vmul.f32 %v1378, %v2050
        %v2122 = vmul.f32 %v1380, %v2052
        %v2123 = vmul.f32 %v1382, %v2054
        %v2124 = vmul.f32 %v1384, %v2056
        %v2125 = vmul.f32 %v1386, %v2058
        %v2126 = vmul.f32 %v1388, %v2060
        %v2127 = vmul.f32 %v1390, %v2062
        %v2128 = vmul.f32 %v1392, %v2064
        %2161 = vrot.lane.b32.xlu0 %v1905, 96
        %v2162 = vpop.permute.xlu0 %2161
        %2163 = vrot.lane.b32.xlu0 %v1906, 96
        %v2164 = vpop.permute.xlu0 %2163
        %2165 = vrot.lane.b32.xlu0 %v1907, 96
        %v2166 = vpop.permute.xlu0 %2165
        %2167 = vrot.lane.b32.xlu0 %v1908, 96
        %v2168 = vpop.permute.xlu0 %2167
        %2169 = vrot.lane.b32.xlu0 %v1909, 96
        %v2170 = vpop.permute.xlu0 %2169
        %2171 = vrot.lane.b32.xlu0 %v1910, 96
        %v2172 = vpop.permute.xlu0 %2171
        %2173 = vrot.lane.b32.xlu0 %v1911, 96
        %v2174 = vpop.permute.xlu0 %2173
        %2175 = vrot.lane.b32.xlu0 %v1912, 96
        %v2176 = vpop.permute.xlu0 %2175
        %2177 = vrot.lane.b32.xlu0 %v1913, 96
        %v2178 = vpop.permute.xlu0 %2177
        %2179 = vrot.lane.b32.xlu0 %v1914, 96
        %v2180 = vpop.permute.xlu0 %2179
        %2181 = vrot.lane.b32.xlu0 %v1915, 96
        %v2182 = vpop.permute.xlu0 %2181
        %2183 = vrot.lane.b32.xlu0 %v1916, 96
        %v2184 = vpop.permute.xlu0 %2183
        %2185 = vrot.lane.b32.xlu0 %v1917, 96
        %v2186 = vpop.permute.xlu0 %2185
        %2187 = vrot.lane.b32.xlu0 %v1918, 96
        %v2188 = vpop.permute.xlu0 %2187
        %2189 = vrot.lane.b32.xlu0 %v1919, 96
        %v2190 = vpop.permute.xlu0 %2189
        %2191 = vrot.lane.b32.xlu0 %v1920, 96
        %v2192 = vpop.permute.xlu0 %2191
        %2193 = vrot.lane.b32.xlu0 %v1921, 96
        %v2194 = vpop.permute.xlu0 %2193
        %2195 = vrot.lane.b32.xlu0 %v1922, 96
        %v2196 = vpop.permute.xlu0 %2195
        %2197 = vrot.lane.b32.xlu0 %v1923, 96
        %v2198 = vpop.permute.xlu0 %2197
        %2199 = vrot.lane.b32.xlu0 %v1924, 96
        %v2200 = vpop.permute.xlu0 %2199
        %2201 = vrot.lane.b32.xlu0 %v1925, 96
        %v2202 = vpop.permute.xlu0 %2201
        %2203 = vrot.lane.b32.xlu0 %v1926, 96
        %v2204 = vpop.permute.xlu0 %2203
        %2205 = vrot.lane.b32.xlu0 %v1927, 96
        %v2206 = vpop.permute.xlu0 %2205
        %2207 = vrot.lane.b32.xlu0 %v1928, 96
        %v2208 = vpop.permute.xlu0 %2207
        %2209 = vrot.lane.b32.xlu0 %v1929, 96
        %v2210 = vpop.permute.xlu0 %2209
        %2211 = vrot.lane.b32.xlu0 %v1930, 96
        %v2212 = vpop.permute.xlu0 %2211
        %2213 = vrot.lane.b32.xlu0 %v1931, 96
        %v2214 = vpop.permute.xlu0 %2213
        %2215 = vrot.lane.b32.xlu0 %v1932, 96
        %v2216 = vpop.permute.xlu0 %2215
        %2217 = vrot.lane.b32.xlu0 %v1933, 96
        %v2218 = vpop.permute.xlu0 %2217
        %2219 = vrot.lane.b32.xlu0 %v1934, 96
        %v2220 = vpop.permute.xlu0 %2219
        %2221 = vrot.lane.b32.xlu0 %v1935, 96
        %v2222 = vpop.permute.xlu0 %2221
        %2223 = vrot.lane.b32.xlu0 %v1936, 96
        %v2224 = vpop.permute.xlu0 %2223
        %vm2257 = vcmask 261120
        %2258 = vst.msk [vmem:[%s357] sm:$0xff] %vm2257, %v2162
        %2259 = vst.msk [vmem:[%s357 + $0x8] sm:$0xff] %vm2257, %v2164
        %2260 = vst.msk [vmem:[%s357 + $0x10] sm:$0xff] %vm2257, %v2166
        %2261 = vst.msk [vmem:[%s357 + $0x18] sm:$0xff] %vm2257, %v2168
        %2262 = vst.msk [vmem:[%s357 + $0x20] sm:$0xff] %vm2257, %v2170
        %2263 = vst.msk [vmem:[%s357 + $0x28] sm:$0xff] %vm2257, %v2172
        %2264 = vst.msk [vmem:[%s357 + $0x30] sm:$0xff] %vm2257, %v2174
        %2265 = vst.msk [vmem:[%s357 + $0x38] sm:$0xff] %vm2257, %v2176
        %2266 = vst.msk [vmem:[%s357 + $0x40] sm:$0xff] %vm2257, %v2178
        %2267 = vst.msk [vmem:[%s357 + $0x48] sm:$0xff] %vm2257, %v2180
        %2268 = vst.msk [vmem:[%s357 + $0x50] sm:$0xff] %vm2257, %v2182
        %2269 = vst.msk [vmem:[%s357 + $0x58] sm:$0xff] %vm2257, %v2184
        %2270 = vst.msk [vmem:[%s357 + $0x60] sm:$0xff] %vm2257, %v2186
        %2271 = vst.msk [vmem:[%s357 + $0x68] sm:$0xff] %vm2257, %v2188
        %2272 = vst.msk [vmem:[%s357 + $0x70] sm:$0xff] %vm2257, %v2190
        %2273 = vst.msk [vmem:[%s357 + $0x78] sm:$0xff] %vm2257, %v2192
        %2274 = vst.msk [vmem:[%s357 + $0x80] sm:$0xff] %vm2257, %v2194
        %2275 = vst.msk [vmem:[%s357 + $0x88] sm:$0xff] %vm2257, %v2196
        %2276 = vst.msk [vmem:[%s357 + $0x90] sm:$0xff] %vm2257, %v2198
        %2277 = vst.msk [vmem:[%s357 + $0x98] sm:$0xff] %vm2257, %v2200
        %2278 = vst.msk [vmem:[%s357 + $0xa0] sm:$0xff] %vm2257, %v2202
        %2279 = vst.msk [vmem:[%s357 + $0xa8] sm:$0xff] %vm2257, %v2204
        %2280 = vst.msk [vmem:[%s357 + $0xb0] sm:$0xff] %vm2257, %v2206
        %2281 = vst.msk [vmem:[%s357 + $0xb8] sm:$0xff] %vm2257, %v2208
        %2282 = vst.msk [vmem:[%s357 + $0xc0] sm:$0xff] %vm2257, %v2210
        %2283 = vst.msk [vmem:[%s357 + $0xc8] sm:$0xff] %vm2257, %v2212
        %2284 = vst.msk [vmem:[%s357 + $0xd0] sm:$0xff] %vm2257, %v2214
        %2285 = vst.msk [vmem:[%s357 + $0xd8] sm:$0xff] %vm2257, %v2216
        %2286 = vst.msk [vmem:[%s357 + $0xe0] sm:$0xff] %vm2257, %v2218
        %2287 = vst.msk [vmem:[%s357 + $0xe8] sm:$0xff] %vm2257, %v2220
        %2288 = vst.msk [vmem:[%s357 + $0xf0] sm:$0xff] %vm2257, %v2222
        %2289 = vst.msk [vmem:[%s357 + $0xf8] sm:$0xff] %vm2257, %v2224
        %2322 = vrot.lane.b32.xlu0 %v2097, 32
        %v2323 = vpop.permute.xlu0 %2322
        %2324 = vrot.lane.b32.xlu0 %v2098, 32
        %v2325 = vpop.permute.xlu0 %2324
        %2326 = vrot.lane.b32.xlu0 %v2099, 32
        %v2327 = vpop.permute.xlu0 %2326
        %2328 = vrot.lane.b32.xlu0 %v2100, 32
        %v2329 = vpop.permute.xlu0 %2328
        %2330 = vrot.lane.b32.xlu0 %v2101, 32
        %v2331 = vpop.permute.xlu0 %2330
        %2332 = vrot.lane.b32.xlu0 %v2102, 32
        %v2333 = vpop.permute.xlu0 %2332
        %2334 = vrot.lane.b32.xlu0 %v2103, 32
        %v2335 = vpop.permute.xlu0 %2334
        %2336 = vrot.lane.b32.xlu0 %v2104, 32
        %v2337 = vpop.permute.xlu0 %2336
        %2338 = vrot.lane.b32.xlu0 %v2105, 32
        %v2339 = vpop.permute.xlu0 %2338
        %2340 = vrot.lane.b32.xlu0 %v2106, 32
        %v2341 = vpop.permute.xlu0 %2340
        %2342 = vrot.lane.b32.xlu0 %v2107, 32
        %v2343 = vpop.permute.xlu0 %2342
        %2344 = vrot.lane.b32.xlu0 %v2108, 32
        %v2345 = vpop.permute.xlu0 %2344
        %2346 = vrot.lane.b32.xlu0 %v2109, 32
        %v2347 = vpop.permute.xlu0 %2346
        %2348 = vrot.lane.b32.xlu0 %v2110, 32
        %v2349 = vpop.permute.xlu0 %2348
        %2350 = vrot.lane.b32.xlu0 %v2111, 32
        %v2351 = vpop.permute.xlu0 %2350
        %2352 = vrot.lane.b32.xlu0 %v2112, 32
        %v2353 = vpop.permute.xlu0 %2352
        %2354 = vrot.lane.b32.xlu0 %v2113, 32
        %v2355 = vpop.permute.xlu0 %2354
        %2356 = vrot.lane.b32.xlu0 %v2114, 32
        %v2357 = vpop.permute.xlu0 %2356
        %2358 = vrot.lane.b32.xlu0 %v2115, 32
        %v2359 = vpop.permute.xlu0 %2358
        %2360 = vrot.lane.b32.xlu0 %v2116, 32
        %v2361 = vpop.permute.xlu0 %2360
        %2362 = vrot.lane.b32.xlu0 %v2117, 32
        %v2363 = vpop.permute.xlu0 %2362
        %2364 = vrot.lane.b32.xlu0 %v2118, 32
        %v2365 = vpop.permute.xlu0 %2364
        %2366 = vrot.lane.b32.xlu0 %v2119, 32
        %v2367 = vpop.permute.xlu0 %2366
        %2368 = vrot.lane.b32.xlu0 %v2120, 32
        %v2369 = vpop.permute.xlu0 %2368
        %2370 = vrot.lane.b32.xlu0 %v2121, 32
        %v2371 = vpop.permute.xlu0 %2370
        %2372 = vrot.lane.b32.xlu0 %v2122, 32
        %v2373 = vpop.permute.xlu0 %2372
        %2374 = vrot.lane.b32.xlu0 %v2123, 32
        %v2375 = vpop.permute.xlu0 %2374
        %2376 = vrot.lane.b32.xlu0 %v2124, 32
        %v2377 = vpop.permute.xlu0 %2376
        %2378 = vrot.lane.b32.xlu0 %v2125, 32
        %v2379 = vpop.permute.xlu0 %2378
        %2380 = vrot.lane.b32.xlu0 %v2126, 32
        %v2381 = vpop.permute.xlu0 %2380
        %2382 = vrot.lane.b32.xlu0 %v2127, 32
        %v2383 = vpop.permute.xlu0 %2382
        %2384 = vrot.lane.b32.xlu0 %v2128, 32
        %v2385 = vpop.permute.xlu0 %2384
        %2418 = vst.msk [vmem:[%s325] sm:$0xff] %vm2257, %v2323
        %2419 = vst.msk [vmem:[%s325 + $0x8] sm:$0xff] %vm2257, %v2325
        %2420 = vst.msk [vmem:[%s325 + $0x10] sm:$0xff] %vm2257, %v2327
        %2421 = vst.msk [vmem:[%s325 + $0x18] sm:$0xff] %vm2257, %v2329
        %2422 = vst.msk [vmem:[%s325 + $0x20] sm:$0xff] %vm2257, %v2331
        %2423 = vst.msk [vmem:[%s325 + $0x28] sm:$0xff] %vm2257, %v2333
        %2424 = vst.msk [vmem:[%s325 + $0x30] sm:$0xff] %vm2257, %v2335
        %2425 = vst.msk [vmem:[%s325 + $0x38] sm:$0xff] %vm2257, %v2337
        %2426 = vst.msk [vmem:[%s325 + $0x40] sm:$0xff] %vm2257, %v2339
        %2427 = vst.msk [vmem:[%s325 + $0x48] sm:$0xff] %vm2257, %v2341
        %2428 = vst.msk [vmem:[%s325 + $0x50] sm:$0xff] %vm2257, %v2343
        %2429 = vst.msk [vmem:[%s325 + $0x58] sm:$0xff] %vm2257, %v2345
        %2430 = vst.msk [vmem:[%s325 + $0x60] sm:$0xff] %vm2257, %v2347
        %2431 = vst.msk [vmem:[%s325 + $0x68] sm:$0xff] %vm2257, %v2349
        %2432 = vst.msk [vmem:[%s325 + $0x70] sm:$0xff] %vm2257, %v2351
        %2433 = vst.msk [vmem:[%s325 + $0x78] sm:$0xff] %vm2257, %v2353
        %2434 = vst.msk [vmem:[%s325 + $0x80] sm:$0xff] %vm2257, %v2355
        %2435 = vst.msk [vmem:[%s325 + $0x88] sm:$0xff] %vm2257, %v2357
        %2436 = vst.msk [vmem:[%s325 + $0x90] sm:$0xff] %vm2257, %v2359
        %2437 = vst.msk [vmem:[%s325 + $0x98] sm:$0xff] %vm2257, %v2361
        %2438 = vst.msk [vmem:[%s325 + $0xa0] sm:$0xff] %vm2257, %v2363
        %2439 = vst.msk [vmem:[%s325 + $0xa8] sm:$0xff] %vm2257, %v2365
        %2440 = vst.msk [vmem:[%s325 + $0xb0] sm:$0xff] %vm2257, %v2367
        %2441 = vst.msk [vmem:[%s325 + $0xb8] sm:$0xff] %vm2257, %v2369
        %2442 = vst.msk [vmem:[%s325 + $0xc0] sm:$0xff] %vm2257, %v2371
        %2443 = vst.msk [vmem:[%s325 + $0xc8] sm:$0xff] %vm2257, %v2373
        %2444 = vst.msk [vmem:[%s325 + $0xd0] sm:$0xff] %vm2257, %v2375
        %2445 = vst.msk [vmem:[%s325 + $0xd8] sm:$0xff] %vm2257, %v2377
        %2446 = vst.msk [vmem:[%s325 + $0xe0] sm:$0xff] %vm2257, %v2379
        %2447 = vst.msk [vmem:[%s325 + $0xe8] sm:$0xff] %vm2257, %v2381
        %2448 = vst.msk [vmem:[%s325 + $0xf0] sm:$0xff] %vm2257, %v2383
        %2449 = vst.msk [vmem:[%s325 + $0xf8] sm:$0xff] %vm2257, %v2385
        %v2450 = vpack.c.bf16 %v2098, %v2097
        %v2451 = vpack.c.bf16 %v2100, %v2099
        %v2452 = vpack.c.bf16 %v2102, %v2101
        %v2453 = vpack.c.bf16 %v2104, %v2103
        %v2454 = vpack.c.bf16 %v2106, %v2105
        %v2455 = vpack.c.bf16 %v2108, %v2107
        %v2456 = vpack.c.bf16 %v2110, %v2109
        %v2457 = vpack.c.bf16 %v2112, %v2111
        %v2458 = vpack.c.bf16 %v2114, %v2113
        %v2459 = vpack.c.bf16 %v2116, %v2115
        %v2460 = vpack.c.bf16 %v2118, %v2117
        %v2461 = vpack.c.bf16 %v2120, %v2119
        %v2462 = vpack.c.bf16 %v2122, %v2121
        %v2463 = vpack.c.bf16 %v2124, %v2123
        %v2464 = vpack.c.bf16 %v2126, %v2125
        %v2465 = vpack.c.bf16 %v2128, %v2127
        %v2466 = vld [vmem:[%s4] sm:$0xf]
        %v2467 = vld [vmem:[%s4 + $0x4] sm:$0xf]
        %v2468 = vld [vmem:[%s4 + $0x8] sm:$0xf]
        %v2469 = vld [vmem:[%s4 + $0xc] sm:$0xf]
        %v2470 = vld [vmem:[%s5] sm:$0x1]
        %v2472 = vlaneseq
        %v2473 = vshrl.u32 %v2472, 7
        %v2474 = vsub.s32 0, %v2473
        %v2475 = vrot.slane %v2470, %v2474
        %2493 = vrot.lane.b32.xlu0 %v2450, 32
        %v2494 = vpop.permute.xlu0 %2493
        %2495 = vrot.lane.b32.xlu0 %v2451, 32
        %v2496 = vpop.permute.xlu0 %2495
        %2497 = vrot.lane.b32.xlu0 %v2452, 32
        %v2498 = vpop.permute.xlu0 %2497
        %2499 = vrot.lane.b32.xlu0 %v2453, 32
        %v2500 = vpop.permute.xlu0 %2499
        %2501 = vrot.lane.b32.xlu0 %v2454, 32
        %v2502 = vpop.permute.xlu0 %2501
        %2503 = vrot.lane.b32.xlu0 %v2455, 32
        %v2504 = vpop.permute.xlu0 %2503
        %2505 = vrot.lane.b32.xlu0 %v2456, 32
        %v2506 = vpop.permute.xlu0 %2505
        %2507 = vrot.lane.b32.xlu0 %v2457, 32
        %v2508 = vpop.permute.xlu0 %2507
        %2509 = vrot.lane.b32.xlu0 %v2458, 32
        %v2510 = vpop.permute.xlu0 %2509
        %2511 = vrot.lane.b32.xlu0 %v2459, 32
        %v2512 = vpop.permute.xlu0 %2511
        %2513 = vrot.lane.b32.xlu0 %v2460, 32
        %v2514 = vpop.permute.xlu0 %2513
        %2515 = vrot.lane.b32.xlu0 %v2461, 32
        %v2516 = vpop.permute.xlu0 %2515
        %2517 = vrot.lane.b32.xlu0 %v2462, 32
        %v2518 = vpop.permute.xlu0 %2517
        %2519 = vrot.lane.b32.xlu0 %v2463, 32
        %v2520 = vpop.permute.xlu0 %2519
        %2521 = vrot.lane.b32.xlu0 %v2464, 32
        %v2522 = vpop.permute.xlu0 %2521
        %2523 = vrot.lane.b32.xlu0 %v2465, 32
        %v2524 = vpop.permute.xlu0 %2523
        %v2529 = vunpack.c.l.b16 %v2466
        %v2530 = vunpack.c.l.b16 %v2467
        %v2531 = vunpack.c.l.b16 %v2468
        %v2532 = vunpack.c.l.b16 %v2469
        %v2533 = vpack.c.b16 %v2530, %v2529
        %v2534 = vpack.c.b16 %v2532, %v2531
        %v2538 = vsel %vm2257, %v2494, 0
        %v2541 = vsel %vm2257, %v2496, 0
        %v2544 = vsel %vm2257, %v2498, 0
        %v2547 = vsel %vm2257, %v2500, 0
        %v2550 = vsel %vm2257, %v2502, 0
        %v2553 = vsel %vm2257, %v2504, 0
        %v2556 = vsel %vm2257, %v2506, 0
        %v2559 = vsel %vm2257, %v2508, 0
        %v2562 = vsel %vm2257, %v2510, 0
        %v2565 = vsel %vm2257, %v2512, 0
        %v2568 = vsel %vm2257, %v2514, 0
        %v2571 = vsel %vm2257, %v2516, 0
        %v2574 = vsel %vm2257, %v2518, 0
        %v2577 = vsel %vm2257, %v2520, 0
        %v2580 = vsel %vm2257, %v2522, 0
        %v2583 = vsel %vm2257, %v2524, 0
        %2585 = vmatprep.subr.bf16.mxu0 0
        %2586 = vmatpush1.bf16.msra.mxu0 %v2533
        %2587 = vmatprep.subr.bf16.mxu0 0
        %2588 = vmatpush1.bf16.msra.mxu0 %v2534
        %2589 = vmatprep.subr.bf16.mxu0 0
        %2590 = vmatpush1.bf16.msra.mxu0 0
        %2591 = vmatprep.subr.bf16.mxu0 0
        %2592 = vmatpush1.bf16.msra.mxu0 0
        %2593 = vmatprep.subr.bf16.mxu0 0
        %2594 = vmatpush1.bf16.msra.mxu0 0
        %2595 = vmatprep.subr.bf16.mxu0 0
        %2596 = vmatpush1.bf16.msra.mxu0 0
        %2597 = vmatprep.subr.bf16.mxu0 0
        %2598 = vmatpush1.bf16.msra.mxu0 0
        %2599 = vmatprep.subr.bf16.mxu0 0
        %2600 = vmatpush1.bf16.msra.mxu0 0
        %2601 = vmatprep.subr.bf16.mxu0 0
        %2602 = vmatpush1.bf16.msra.mxu0 0
        %2603 = vmatprep.subr.bf16.mxu0 0
        %2604 = vmatpush1.bf16.msra.mxu0 0
        %2605 = vmatprep.subr.bf16.mxu0 0
        %2606 = vmatpush1.bf16.msra.mxu0 0
        %2607 = vmatprep.subr.bf16.mxu0 0
        %2608 = vmatpush1.bf16.msra.mxu0 0
        %2609 = vmatprep.subr.bf16.mxu0 0
        %2610 = vmatpush1.bf16.msra.mxu0 0
        %2611 = vmatprep.subr.bf16.mxu0 0
        %2612 = vmatpush1.bf16.msra.mxu0 0
        %2613 = vmatprep.subr.bf16.mxu0 0
        %2614 = vmatpush1.bf16.msra.mxu0 0
        %2615 = vmatprep.subr.bf16.mxu0 0
        %2616 = vmatpush1.bf16.msra.mxu0 0
        %2617 = vmatprep.mubr.bf16.mxu0 0
        %2618 = vmatmul.mubr.bf16.gmra.mrb[0].mxu0 %v2538
        %v2619 = vpop.f32.mrb[0].mxu0
        %v2620 = vadd.f32 %v2475, %v2619
        %v2621 = vpop.f32.mrb[0].mxu0
        %v2622 = vpop.f32.mrb[0].mxu0
        %v2623 = vadd.f32 %v2475, %v2622
        %v2624 = vpop.f32.mrb[0].mxu0
        %2625 = vmatprep.mubr.bf16.mxu0 0
        %2626 = vmatmul.mubr.bf16.gmra.mrb[0].mxu0 %v2541
        %v2627 = vpop.f32.mrb[0].mxu0
        %v2628 = vadd.f32 %v2475, %v2627
        %v2629 = vpop.f32.mrb[0].mxu0
        %v2630 = vpop.f32.mrb[0].mxu0
        %v2631 = vadd.f32 %v2475, %v2630
        %v2632 = vpop.f32.mrb[0].mxu0
        %2633 = vmatprep.mubr.bf16.mxu0 0
        %2634 = vmatmul.mubr.bf16.gmra.mrb[0].mxu0 %v2544
        %v2635 = vpop.f32.mrb[0].mxu0
        %v2636 = vadd.f32 %v2475, %v2635
        %v2637 = vpop.f32.mrb[0].mxu0
        %v2638 = vpop.f32.mrb[0].mxu0
        %v2639 = vadd.f32 %v2475, %v2638
        %v2640 = vpop.f32.mrb[0].mxu0
        %2641 = vmatprep.mubr.bf16.mxu0 0
        %2642 = vmatmul.mubr.bf16.gmra.mrb[0].mxu0 %v2547
        %v2643 = vpop.f32.mrb[0].mxu0
        %v2644 = vadd.f32 %v2475, %v2643
        %v2645 = vpop.f32.mrb[0].mxu0
        %v2646 = vpop.f32.mrb[0].mxu0
        %v2647 = vadd.f32 %v2475, %v2646
        %v2648 = vpop.f32.mrb[0].mxu0
        %2649 = vmatprep.mubr.bf16.mxu0 0
        %2650 = vmatmul.mubr.bf16.gmra.mrb[0].mxu0 %v2550
        %v2651 = vpop.f32.mrb[0].mxu0
        %v2652 = vadd.f32 %v2475, %v2651
        %v2653 = vpop.f32.mrb[0].mxu0
        %v2654 = vpop.f32.mrb[0].mxu0
        %v2655 = vadd.f32 %v2475, %v2654
        %v2656 = vpop.f32.mrb[0].mxu0
        %2657 = vmatprep.mubr.bf16.mxu0 0
        %2658 = vmatmul.mubr.bf16.gmra.mrb[0].mxu0 %v2553
        %v2659 = vpop.f32.mrb[0].mxu0
        %v2660 = vadd.f32 %v2475, %v2659
        %v2661 = vpop.f32.mrb[0].mxu0
        %v2662 = vpop.f32.mrb[0].mxu0
        %v2663 = vadd.f32 %v2475, %v2662
        %v2664 = vpop.f32.mrb[0].mxu0
        %2665 = vmatprep.mubr.bf16.mxu0 0
        %2666 = vmatmul.mubr.bf16.gmra.mrb[0].mxu0 %v2556
        %v2667 = vpop.f32.mrb[0].mxu0
        %v2668 = vadd.f32 %v2475, %v2667
        %v2669 = vpop.f32.mrb[0].mxu0
        %v2670 = vpop.f32.mrb[0].mxu0
        %v2671 = vadd.f32 %v2475, %v2670
        %v2672 = vpop.f32.mrb[0].mxu0
        %2673 = vmatprep.mubr.bf16.mxu0 0
        %2674 = vmatmul.mubr.bf16.gmra.mrb[0].mxu0 %v2559
        %v2675 = vpop.f32.mrb[0].mxu0
        %v2676 = vadd.f32 %v2475, %v2675
        %v2677 = vpop.f32.mrb[0].mxu0
        %v2678 = vpop.f32.mrb[0].mxu0
        %v2679 = vadd.f32 %v2475, %v2678
        %v2680 = vpop.f32.mrb[0].mxu0
        %2681 = vmatprep.mubr.bf16.mxu0 0
        %2682 = vmatmul.mubr.bf16.gmra.mrb[0].mxu0 %v2562
        %v2683 = vpop.f32.mrb[0].mxu0
        %v2684 = vadd.f32 %v2475, %v2683
        %v2685 = vpop.f32.mrb[0].mxu0
        %v2686 = vpop.f32.mrb[0].mxu0
        %v2687 = vadd.f32 %v2475, %v2686
        %v2688 = vpop.f32.mrb[0].mxu0
        %2689 = vmatprep.mubr.bf16.mxu0 0
        %2690 = vmatmul.mubr.bf16.gmra.mrb[0].mxu0 %v2565
        %v2691 = vpop.f32.mrb[0].mxu0
        %v2692 = vadd.f32 %v2475, %v2691
        %v2693 = vpop.f32.mrb[0].mxu0
        %v2694 = vpop.f32.mrb[0].mxu0
        %v2695 = vadd.f32 %v2475, %v2694
        %v2696 = vpop.f32.mrb[0].mxu0
        %2697 = vmatprep.mubr.bf16.mxu0 0
        %2698 = vmatmul.mubr.bf16.gmra.mrb[0].mxu0 %v2568
        %v2699 = vpop.f32.mrb[0].mxu0
        %v2700 = vadd.f32 %v2475, %v2699
        %v2701 = vpop.f32.mrb[0].mxu0
        %v2702 = vpop.f32.mrb[0].mxu0
        %v2703 = vadd.f32 %v2475, %v2702
        %v2704 = vpop.f32.mrb[0].mxu0
        %2705 = vmatprep.mubr.bf16.mxu0 0
        %2706 = vmatmul.mubr.bf16.gmra.mrb[0].mxu0 %v2571
        %v2707 = vpop.f32.mrb[0].mxu0
        %v2708 = vadd.f32 %v2475, %v2707
        %v2709 = vpop.f32.mrb[0].mxu0
        %v2710 = vpop.f32.mrb[0].mxu0
        %v2711 = vadd.f32 %v2475, %v2710
        %v2712 = vpop.f32.mrb[0].mxu0
        %2713 = vmatprep.mubr.bf16.mxu0 0
        %2714 = vmatmul.mubr.bf16.gmra.mrb[0].mxu0 %v2574
        %v2715 = vpop.f32.mrb[0].mxu0
        %v2716 = vadd.f32 %v2475, %v2715
        %v2717 = vpop.f32.mrb[0].mxu0
        %v2718 = vpop.f32.mrb[0].mxu0
        %v2719 = vadd.f32 %v2475, %v2718
        %v2720 = vpop.f32.mrb[0].mxu0
        %2721 = vmatprep.mubr.bf16.mxu0 0
        %2722 = vmatmul.mubr.bf16.gmra.mrb[0].mxu0 %v2577
        %v2723 = vpop.f32.mrb[0].mxu0
        %v2724 = vadd.f32 %v2475, %v2723
        %v2725 = vpop.f32.mrb[0].mxu0
        %v2726 = vpop.f32.mrb[0].mxu0
        %v2727 = vadd.f32 %v2475, %v2726
        %v2728 = vpop.f32.mrb[0].mxu0
        %2729 = vmatprep.mubr.bf16.mxu0 0
        %2730 = vmatmul.mubr.bf16.gmra.mrb[0].mxu0 %v2580
        %v2731 = vpop.f32.mrb[0].mxu0
        %v2732 = vadd.f32 %v2475, %v2731
        %v2733 = vpop.f32.mrb[0].mxu0
        %v2734 = vpop.f32.mrb[0].mxu0
        %v2735 = vadd.f32 %v2475, %v2734
        %v2736 = vpop.f32.mrb[0].mxu0
        %2737 = vmatprep.mubr.bf16.mxu0 0
        %2738 = vmatmul.mubr.bf16.gmra.mrb[0].mxu0 %v2583
        %v2739 = vpop.f32.mrb[0].mxu0
        %v2740 = vadd.f32 %v2475, %v2739
        %v2741 = vpop.f32.mrb[0].mxu0
        %v2742 = vpop.f32.mrb[0].mxu0
        %v2743 = vadd.f32 %v2475, %v2742
        %v2744 = vpop.f32.mrb[0].mxu0
        %2745 = vdwg.mxu0
        %vm2746 = vcmask 15360
        %2747 = vst.msk [vmem:[%s350] sm:$0xff] %vm2746, %v2620
        %2748 = vst.msk [vmem:[%s350 + $0x8] sm:$0xff] %vm2746, %v2623
        %2749 = vst.msk [vmem:[%s350 + $0x10] sm:$0xff] %vm2746, %v2628
        %2750 = vst.msk [vmem:[%s350 + $0x18] sm:$0xff] %vm2746, %v2631
        %2751 = vst.msk [vmem:[%s350 + $0x20] sm:$0xff] %vm2746, %v2636
        %2752 = vst.msk [vmem:[%s350 + $0x28] sm:$0xff] %vm2746, %v2639
        %2753 = vst.msk [vmem:[%s350 + $0x30] sm:$0xff] %vm2746, %v2644
        %2754 = vst.msk [vmem:[%s350 + $0x38] sm:$0xff] %vm2746, %v2647
        %2755 = vst.msk [vmem:[%s350 + $0x40] sm:$0xff] %vm2746, %v2652
        %2756 = vst.msk [vmem:[%s350 + $0x48] sm:$0xff] %vm2746, %v2655
        %2757 = vst.msk [vmem:[%s350 + $0x50] sm:$0xff] %vm2746, %v2660
        %2758 = vst.msk [vmem:[%s350 + $0x58] sm:$0xff] %vm2746, %v2663
        %2759 = vst.msk [vmem:[%s350 + $0x60] sm:$0xff] %vm2746, %v2668
        %2760 = vst.msk [vmem:[%s350 + $0x68] sm:$0xff] %vm2746, %v2671
        %2761 = vst.msk [vmem:[%s350 + $0x70] sm:$0xff] %vm2746, %v2676
        %2762 = vst.msk [vmem:[%s350 + $0x78] sm:$0xff] %vm2746, %v2679
        %2763 = vst.msk [vmem:[%s350 + $0x80] sm:$0xff] %vm2746, %v2684
        %2764 = vst.msk [vmem:[%s350 + $0x88] sm:$0xff] %vm2746, %v2687
        %2765 = vst.msk [vmem:[%s350 + $0x90] sm:$0xff] %vm2746, %v2692
        %2766 = vst.msk [vmem:[%s350 + $0x98] sm:$0xff] %vm2746, %v2695
        %2767 = vst.msk [vmem:[%s350 + $0xa0] sm:$0xff] %vm2746, %v2700
        %2768 = vst.msk [vmem:[%s350 + $0xa8] sm:$0xff] %vm2746, %v2703
        %2769 = vst.msk [vmem:[%s350 + $0xb0] sm:$0xff] %vm2746, %v2708
        %2770 = vst.msk [vmem:[%s350 + $0xb8] sm:$0xff] %vm2746, %v2711
        %2771 = vst.msk [vmem:[%s350 + $0xc0] sm:$0xff] %vm2746, %v2716
        %2772 = vst.msk [vmem:[%s350 + $0xc8] sm:$0xff] %vm2746, %v2719
        %2773 = vst.msk [vmem:[%s350 + $0xd0] sm:$0xff] %vm2746, %v2724
        %2774 = vst.msk [vmem:[%s350 + $0xd8] sm:$0xff] %vm2746, %v2727
        %2775 = vst.msk [vmem:[%s350 + $0xe0] sm:$0xff] %vm2746, %v2732
        %2776 = vst.msk [vmem:[%s350 + $0xe8] sm:$0xff] %vm2746, %v2735
        %2777 = vst.msk [vmem:[%s350 + $0xf0] sm:$0xff] %vm2746, %v2740
        %2778 = vst.msk [vmem:[%s350 + $0xf8] sm:$0xff] %vm2746, %v2743
        %s2779 = smul.u32 32, %s23
        %p2780 = scmp.lt.s32.totalorder %s2779, 63
        %s2781 = scalar_select %p2780, %s2779, 63
        %s2782 = smul.addr %s2781, 8
        %s2783 = scalar_lea.vmem %s6, %s2782
        %s2784 = sand.u32 %s193, 1
        %s2785 = scalar_lea.sflag [#allocation3], %s2784
        %s2786 = sand.u32 %s193, 1
        %s2787 = smul.addr %s2786, 256
        %s2788 = scalar_lea.vmem [#allocation2], %s2787
        %s2789 = smul.u32 32, %s23
        %p2790 = scmp.lt.s32.totalorder %s2789, 63
        %s2791 = scalar_select %p2790, %s2789, 63
        %s2792 = smul.addr %s2791, 8
        %s2793 = scalar_lea.vmem %s8, %s2792
        // Predicated region
        $region45: #{convlstm_cell_step.1} parent=43 // pred_check
          %p2794 = pneg %p177
        $region46: #{convlstm_cell_step.1} parent=43 // pred_check_branch
          %2796 = sbr.rel (%p2794) target = $region48
        $region47: #{convlstm_cell_step.1} parent=43 // pred_region
          %s2797 = smul.u32 32, %s23
        $region48: #{convlstm_cell_step.1} parent=43 // pred_fallthru
          _
        // Predicated region
        $region49: #{convlstm_cell_step.1} parent=43 // pred_check
          %p2798 = pneg %p203
        $region50: #{convlstm_cell_step.1} parent=43 // pred_check_branch
          %2800 = sbr.rel (%p2798) target = $region52
        $region51: #{convlstm_cell_step.1} parent=43 // pred_region
          %s2801 = smul.u32 32, %s23
          %s2803 = ssub.s32 4096, 4096
          %2804 = vsyncadd %s2785, %s2803
          %s2805 = smul.addr %s2801, 128
          %s2806 = scalar_lea.hbm %s7, %s2805
          %s2807 = sshll.u32 %s2788, 4
          %s2808 = int_to_ptr.vmem [resolvable:$true] %s2807
          %2813 = dma.vmem_to_hbm [thread:$0]  %s2808, 4096, %s2806, %s2785, 128, 128, 8
        $region52: #{convlstm_cell_step.1} parent=43 // pred_fallthru
          _
        // Predicated region
        $region53: #{convlstm_cell_step.1} parent=43 // pred_check
          %p2814 = pneg %p229
        $region54: #{convlstm_cell_step.1} parent=43 // pred_check_branch
          %2816 = sbr.rel (%p2814) target = $region56
        $region55: #{convlstm_cell_step.1} parent=43 // pred_region
          %s2817 = smul.u32 32, %s23
        $region56: #{convlstm_cell_step.1} parent=43 // pred_fallthru
          _
      $region44: #{convlstm_cell_step.1} parent=5 // pred_fallthru
        _
      %p2818 = scmp.le.s32.totalorder 2, %s18
      // Predicated region
      $region57: #{convlstm_cell_step.1} parent=5 // pred_check
        %p2819 = pneg %p2818
      $region58: #{convlstm_cell_step.1} parent=5 // pred_check_branch
        %2821 = sbr.rel (%p2819) target = $region60
      $region59: #{convlstm_cell_step.1} parent=5 // pred_region
        %s2822 = ssub.s32 %s18, 2
        // Predicated region
        $region61: #{convlstm_cell_step.1} parent=59 // pred_check
          %p2823 = pneg %p183
        $region62: #{convlstm_cell_step.1} parent=59 // pred_check_branch
          %2825 = sbr.rel (%p2823) target = $region64
        $region63: #{convlstm_cell_step.1} parent=59 // pred_region
          %s2826 = smul.u32 32, %s24
          %p2827 = scmp.lt.s32.totalorder %s2826, 63
          %s2828 = scalar_select %p2827, %s2826, 63
          %s2829 = smul.addr %s2828, 8
          %s2830 = scalar_lea.vmem %s6, %s2829
        $region64: #{convlstm_cell_step.1} parent=59 // pred_fallthru
          _
        // Predicated region
        $region65: #{convlstm_cell_step.1} parent=59 // pred_check
          %p2831 = pneg %p209
        $region66: #{convlstm_cell_step.1} parent=59 // pred_check_branch
          %2833 = sbr.rel (%p2831) target = $region68
        $region67: #{convlstm_cell_step.1} parent=59 // pred_region
          %s2834 = sand.u32 %s194, 1
          %s2835 = scalar_lea.sflag [#allocation3], %s2834
          %s2836 = sand.u32 %s194, 1
          %s2837 = smul.addr %s2836, 256
          %s2838 = scalar_lea.vmem [#allocation2], %s2837
          %2839 = dma.done %s2835, 4096
        $region68: #{convlstm_cell_step.1} parent=59 // pred_fallthru
          _
        // Predicated region
        $region69: #{convlstm_cell_step.1} parent=59 // pred_check
          %p2840 = pneg %p235
        $region70: #{convlstm_cell_step.1} parent=59 // pred_check_branch
          %2842 = sbr.rel (%p2840) target = $region72
        $region71: #{convlstm_cell_step.1} parent=59 // pred_region
          %s2843 = smul.u32 32, %s24
          %p2844 = scmp.lt.s32.totalorder %s2843, 63
          %s2845 = scalar_select %p2844, %s2843, 63
          %s2846 = smul.addr %s2845, 8
          %s2847 = scalar_lea.vmem %s8, %s2846
        $region72: #{convlstm_cell_step.1} parent=59 // pred_fallthru
          _
      $region60: #{convlstm_cell_step.1} parent=5 // pred_fallthru
        _
    $region6: #{convlstm_cell_step.1} parent=1 // loop_footer
      %s22 = sadd.s32 1, %s18
    $region7: #{convlstm_cell_step.1} parent=1 // loop_footer_branch
      %17 = sbr.rel target = $region3
    $region8: #{convlstm_cell_step.1} parent=1 // loop_exit
      _
    %2848 = vsyncpa [#allocation3], 1
    %s2849 = scalar_lea.sflag [#allocation3], 1
    %2850 = vsyncpa %s2849, 1

</llo_original>
